<compile_context>
chip_gen: v5e
topology: v5e:2x2
jax: 0.10.0
libtpu: 0.0.40
codegen_flags: <defaults>
</compile_context>

<pallas_src>
import jax
import jax.numpy as jnp
from jax.experimental import pallas as pl
from jax.experimental.pallas import tpu as pltpu


UNROLL_CAP = 64   # max recurrence steps statically unrolled per kernel body


# ----------------------------- kernel helpers --------------------------------

def _act(z, act):
    if act == 'tanh':
        return jnp.tanh(z)
    if act == 'relu':
        return jnp.maximum(z, 0.0)
    if act == 'none':
        return z
    raise NotImplementedError(act)


def _gates(x_ref, wz_ref, wf_ref, bz_ref, bf_ref, act):
    """1x1-conv gates for the whole block: two small-K MXU matmuls (no [:, :H]
    lane-offset slicing of a combined gate block).  x_ref: (C, LT)."""
    x = x_ref[...]
    z = jnp.dot(wz_ref[...], x, preferred_element_type=jnp.float32) + bz_ref[...]
    f = jnp.dot(wf_ref[...], x, preferred_element_type=jnp.float32) + bf_ref[...]
    return _act(z, act), jax.nn.sigmoid(f)


# ----------------------------- kernels ----------------------------------------

def make_fused_kernel(act, T, N):
    """Single-pass kernel: gates + hs + forward fo-pool (hsl kept in VMEM) +
    backward fo-pool fused with the final hsl + hsr sum.  Whole T per block."""

    def kernel(x_ref, wz_ref, wf_ref, bz_ref, bf_ref, hs_ref, o_ref,
               f_scr, hsl_scr):
        z, f = _gates(x_ref, wz_ref, wf_ref, bz_ref, bf_ref, act)
        f_scr[...] = f
        hs_ref[...] = (1.0 - f) * z          # hs output doubles as the scan buffer

        h0 = jnp.zeros((o_ref.shape[0], N), jnp.float32)

        h = h0                               # forward: h_t = f_t h_{t-1} + hs_t
        for t in range(T):                   # static unroll -> static lane slices
            sl = slice(t * N, (t + 1) * N)
            h = f_scr[:, sl] * h + hs_ref[:, sl]
            hsl_scr[:, sl] = h

        h = h0                               # backward + fused (hsl + hsr)
        for s in range(T):
            t = T - 1 - s
            sl = slice(t * N, (t + 1) * N)
            h = f_scr[:, sl] * h + hs_ref[:, sl]
            o_ref[:, sl] = hsl_scr[:, sl] + h

    return kernel


def make_fwd_kernel(act, t_blk, N):
    """Two-pass / pass 1: gates + hs + forward fo-pool for one (b, h, T) block.
    The h carry crosses T blocks via a small VMEM scratch (T axis 'arbitrary')."""

    def kernel(x_ref, wz_ref, wf_ref, bz_ref, bf_ref, hs_ref, hsl_ref,
               f_scr, h_scr):
        z, f = _gates(x_ref, wz_ref, wf_ref, bz_ref, bf_ref, act)
        f_scr[...] = f
        hs_ref[...] = (1.0 - f) * z

        @pl.when(pl.program_id(2) == 0)      # h = None at t == 0
        def _():
            h_scr[...] = jnp.zeros_like(h_scr)

        h = h_scr[...]
        for t in range(t_blk):
            sl = slice(t * N, (t + 1) * N)
            h = f_scr[:, sl] * h + hs_ref[:, sl]
            hsl_ref[:, sl] = h
        h_scr[...] = h

    return kernel


def make_bwd_kernel(act, t_blk, N):
    """Two-pass / pass 2: gates recomputed from x (cheaper than re-reading them),
    backward fo-pool, fused hsl + hsr sum.  T walked in reverse via index_map."""

    def kernel(x_ref, wz_ref, wf_ref, bz_ref, bf_ref, hsl_ref, o_ref,
               f_scr, hs_scr, h_scr):
        z, f = _gates(x_ref, wz_ref, wf_ref, bz_ref, bf_ref, act)
        f_scr[...] = f
        hs_scr[...] = (1.0 - f) * z

        @pl.when(pl.program_id(2) == 0)      # h = None at t == T-1
        def _():
            h_scr[...] = jnp.zeros_like(h_scr)

        h = h_scr[...]
        for s in range(t_blk):
            t = t_blk - 1 - s                # walk this block backwards
            sl = slice(t * N, (t + 1) * N)
            h = f_scr[:, sl] * h + hs_scr[:, sl]
            o_ref[:, sl] = hsl_ref[:, sl] + h
        h_scr[...] = h

    return kernel


# ----------------------------- wrapper -----------------------------------------

def _divisors(n):
    return [d for d in range(1, n + 1) if n % d == 0]


def _pick_h_blk(H, B, h_blk):
    if h_blk is not None:
        assert H % h_blk == 0 and (h_blk % 8 == 0 or h_blk == H)
        return h_blk
    if B >= 2:
        return H            # batch axis already feeds both v7x TensorCores
    # B == 1: output channels are independent -> split H so both cores get work
    cands = [d for d in _divisors(H) if d % 8 == 0 and d < H]
    return max(cands) if cands else H


def _pick_t_blk(T, N, C, h_blk, budget, t_blk):
    # valid blocks: divide T and give a lane-aligned (multiple-of-128) last dim
    valid = [d for d in _divisors(T) if (d * N) % 128 == 0 or d == T]
    if t_blk is not None:
        assert t_blk in valid, "t_blk must divide T and give a 128-aligned block"
        return t_blk
    per_t = 4 * N * (2 * C + 6 * h_blk)      # f32 working-set bytes per timestep
    cap = max(1, min(T, UNROLL_CAP, budget // max(per_t, 1)))
    under = [d for d in valid if d <= cap]
    return max(under) if under else min(valid)


def sparse_qrnn_forward(x, w, b, act='tanh', t_blk=None, h_blk=None,
                        force_two_pass=False):
    """x: (B, C_in, T, N) f32;  w: (2H, C_in) 1x1-conv weight ([Z; F] order);
    b: (2H,).  Returns (hsl + hsr, hs), each (B, H, T, N), matching the module."""
    B, C, T, N = x.shape
    H = w.shape[0] // 2
    f32 = jnp.float32
    LTF = T * N

    # Free views / tiny param reshapes only -- no wrapper transposes of big arrays.
    x_f = x.reshape(B, C, LTF).astype(f32)
    w_z = w[:H, :].astype(f32)               # (H, C)   Z weights
    w_f = w[H:, :].astype(f32)               # (H, C)   F weights
    b_z = b[:H].reshape(H, 1).astype(f32)
    b_f = b[H:].reshape(H, 1).astype(f32)

    # Generation-aware VMEM budget (128 MiB on v5e/v6e, 64 MiB per core on v7x).
    try:
        vmem_cap = pltpu.get_tpu_info().vmem_capacity_bytes
    except Exception:
        vmem_cap = 64 << 20                  # conservative (v7x) fallback
    budget = int(0.45 * vmem_cap)            # working-set budget for block sizing
    vmem_limit = int(min(0.75 * vmem_cap, 100 * (1 << 20)))

    h_blk = _pick_h_blk(H, B, h_blk)
    nH = H // h_blk

    def cparams(sems):
        return pltpu.CompilerParams(dimension_semantics=sems,
                                    vmem_limit_bytes=vmem_limit)

    # ---------------- single-pass path: whole T resident in VMEM ----------------
    single = (not force_two_pass and t_blk is None and T <= UNROLL_CAP
              and 4 * T * N * (2 * C + 6 * h_blk) <= budget)

    if single:
        hs_f, hsum_f = pl.pallas_call(
            make_fused_kernel(act, T, N),
            out_shape=(jax.ShapeDtypeStruct((B, H, LTF), f32),   # hs
                       jax.ShapeDtypeStruct((B, H, LTF), f32)),  # hsl + hsr
            grid_spec=pltpu.PrefetchScalarGridSpec(
                num_scalar_prefetch=0, grid=(B, nH),
                in_specs=[
                    pl.BlockSpec((None, C, LTF), lambda bi, hj: (bi, 0, 0)),
                    pl.BlockSpec((h_blk, C), lambda bi, hj: (hj, 0)),
                    pl.BlockSpec((h_blk, C), lambda bi, hj: (hj, 0)),
                    pl.BlockSpec((h_blk, 1), lambda bi, hj: (hj, 0)),
                    pl.BlockSpec((h_blk, 1), lambda bi, hj: (hj, 0)),
                ],
                out_specs=[
                    pl.BlockSpec((None, h_blk, LTF), lambda bi, hj: (bi, hj, 0)),
                    pl.BlockSpec((None, h_blk, LTF), lambda bi, hj: (bi, hj, 0)),
                ],
                scratch_shapes=[pltpu.VMEM((h_blk, LTF), f32),   # f
                                pltpu.VMEM((h_blk, LTF), f32)]), # hsl (never hits HBM)
            compiler_params=cparams(("parallel", "parallel")),
        )(x_f, w_z, w_f, b_z, b_f)
        return hsum_f.reshape(B, H, T, N), hs_f.reshape(B, H, T, N)

    # ---------------- two-pass path: T blocked, carry in VMEM scratch -----------
    t_blk = _pick_t_blk(T, N, C, h_blk, budget, t_blk)
    nT = T // t_blk
    LT = t_blk * N
    # (B, H) blocks are independent -> "parallel"; T carries the recurrence and
    # must run in ascending grid order on one core -> "arbitrary".
    sems = ("parallel", "parallel", "arbitrary")

    x_spec_f = pl.BlockSpec((None, C, LT), lambda bi, hj, ti: (bi, 0, ti))
    x_spec_r = pl.BlockSpec((None, C, LT), lambda bi, hj, ti: (bi, 0, nT - 1 - ti))
    h_spec_f = pl.BlockSpec((None, h_blk, LT), lambda bi, hj, ti: (bi, hj, ti))
    h_spec_r = pl.BlockSpec((None, h_blk, LT), lambda bi, hj, ti: (bi, hj, nT - 1 - ti))
    w_spec = pl.BlockSpec((h_blk, C), lambda bi, hj, ti: (hj, 0))
    bias_spec = pl.BlockSpec((h_blk, 1), lambda bi, hj, ti: (hj, 0))

    # pass 1: gates + hs + forward fo-pool (hsl)
    hs_f, hsl_f = pl.pallas_call(
        make_fwd_kernel(act, t_blk, N),
        out_shape=(jax.ShapeDtypeStruct((B, H, LTF), f32),
                   jax.ShapeDtypeStruct((B, H, LTF), f32)),
        grid_spec=pltpu.PrefetchScalarGridSpec(
            num_scalar_prefetch=0, grid=(B, nH, nT),
            in_specs=[x_spec_f, w_spec, w_spec, bias_spec, bias_spec],
            out_specs=[h_spec_f, h_spec_f],
            scratch_shapes=[pltpu.VMEM((h_blk, LT), f32),        # f block
                            pltpu.VMEM((h_blk, N), f32)]),       # h carry
        compiler_params=cparams(sems),
    )(x_f, w_z, w_f, b_z, b_f)

    # pass 2: gates recomputed + backward fo-pool, fused with hsl + hsr
    hsum_f = pl.pallas_call(
        make_bwd_kernel(act, t_blk, N),
        out_shape=jax.ShapeDtypeStruct((B, H, LTF), f32),
        grid_spec=pltpu.PrefetchScalarGridSpec(
            num_scalar_prefetch=0, grid=(B, nH, nT),
            in_specs=[x_spec_r, w_spec, w_spec, bias_spec, bias_spec, h_spec_r],
            out_specs=h_spec_r,
            scratch_shapes=[pltpu.VMEM((h_blk, LT), f32),        # f block
                            pltpu.VMEM((h_blk, LT), f32),        # hs block
                            pltpu.VMEM((h_blk, N), f32)]),       # h carry
        compiler_params=cparams(sems),
    )(x_f, w_z, w_f, b_z, b_f, hsl_f)

    return hsum_f.reshape(B, H, T, N), hs_f.reshape(B, H, T, N)


# ----------------------------- pure-JAX reference --------------------------------

def reference(x, w, b, act='tanh'):
    B, C, T, N = x.shape
    H = w.shape[0] // 2
    gates = jnp.einsum('bctn,oc->botn', x, w) + b[None, :, None, None]
    Z, F = gates[:, :H], gates[:, H:]
    if act == 'tanh':
        Z = jnp.tanh(Z)
    elif act == 'relu':
        Z = jnp.maximum(Z, 0.0)
    F = jax.nn.sigmoid(F)

    Zt = jnp.moveaxis(Z, 2, 0)   # (T, B, H, N)
    Ft = jnp.moveaxis(F, 2, 0)

    def step(h, zf):
        z, f = zf
        h = f * h + (1.0 - f) * z
        return h, h

    h0 = (1.0 - Ft[0]) * Zt[0]
    _, rest = jax.lax.scan(step, h0, (Zt[1:], Ft[1:]))
    hsl = jnp.concatenate([h0[None], rest], axis=0)

    Ztr, Ftr = Zt[::-1], Ft[::-1]
    h0r = (1.0 - Ftr[0]) * Ztr[0]
    _, restr = jax.lax.scan(step, h0r, (Ztr[1:], Ftr[1:]))
    hsr = jnp.concatenate([h0r[None], restr], axis=0)[::-1]

    hs = (1.0 - F) * Z
    return jnp.moveaxis(hsl + hsr, 0, 2), hs


# ----------------------------- main -----------------------------------------------

if __name__ == "__main__":
    B, C_in, T, N, H = 2, 4, 16, 16, 32
    key = jax.random.PRNGKey(0)
    kx, kw, kb = jax.random.split(key, 3)
    x = jax.random.normal(kx, (B, C_in, T, N), dtype=jnp.float32)
    # deterministic "conv" params (1x1 Conv2d: weight (2H, C_in), bias (2H,))
    w = 0.3 * jax.random.normal(kw, (2 * H, C_in), dtype=jnp.float32)
    b = 0.1 * jax.random.normal(kb, (2 * H,), dtype=jnp.float32)

    ref_sum, ref_hs = reference(x, w, b, act='tanh')

    # Path 1 (default): fused single-pass kernel (whole T resident in VMEM).
    out_sum, out_hs = sparse_qrnn_forward(x, w, b, act='tanh')
    jax.block_until_ready((out_sum, out_hs))
    assert out_sum.shape == (B, H, T, N) and out_hs.shape == (B, H, T, N)
    assert jnp.allclose(out_sum, ref_sum, atol=1e-5, rtol=1e-5)
    assert jnp.allclose(out_hs, ref_hs, atol=1e-5, rtol=1e-5)

    # Path 2: T-blocked two-pass pipeline (cross-block h carry, reverse-T
    # index_map, H-split parallel axis) -- exercised so both paths are verified.
    out_sum2, out_hs2 = sparse_qrnn_forward(x, w, b, act='tanh',
                                            force_two_pass=True, t_blk=8, h_blk=16)
    jax.block_until_ready((out_sum2, out_hs2))
    assert jnp.allclose(out_sum2, ref_sum, atol=1e-5, rtol=1e-5)
    assert jnp.allclose(out_hs2, ref_hs, atol=1e-5, rtol=1e-5)

    print("KERNEL_OK")
</pallas_src>

<mosaic_0001>
module attributes {stable_mosaic.version = 11 : i64} {
  func.func @kernel(%arg0: i32, %arg1: i32, %arg2: memref<1x4x256xf32, #tpu.memory_space<vmem>>, %arg3: memref<32x4xf32, #tpu.memory_space<vmem>>, %arg4: memref<32x4xf32, #tpu.memory_space<vmem>>, %arg5: memref<32x1xf32, #tpu.memory_space<vmem>>, %arg6: memref<32x1xf32, #tpu.memory_space<vmem>>, %arg7: memref<1x32x256xf32, #tpu.memory_space<vmem>>, %arg8: memref<1x32x256xf32, #tpu.memory_space<vmem>>, %arg9: memref<32x256xf32, #tpu.memory_space<vmem>>, %arg10: memref<32x256xf32, #tpu.memory_space<vmem>>) attributes {dimension_semantics = [#tpu.dimension_semantics<parallel>, #tpu.dimension_semantics<parallel>], iteration_bounds = array<i64: 2, 1>, scalar_prefetch = 0 : i64, scratch_operands = 2 : i64, tpu.core_type = #tpu.core_type<tc>, window_params = [{transform_indices = @transform_0, window_bounds = array<i64: 1, 4, 256>}, {transform_indices = @transform_1, window_bounds = array<i64: 32, 4>}, {transform_indices = @transform_2, window_bounds = array<i64: 32, 4>}, {transform_indices = @transform_3, window_bounds = array<i64: 32, 1>}, {transform_indices = @transform_4, window_bounds = array<i64: 32, 1>}, {transform_indices = @transform_5, window_bounds = array<i64: 1, 32, 256>}, {transform_indices = @transform_6, window_bounds = array<i64: 1, 32, 256>}]} {
    %c0 = arith.constant 0 : index
    %c0_0 = arith.constant 0 : index
    %c0_1 = arith.constant 0 : index
    %0 = vector.load %arg2[%c0, %c0_0, %c0_1] : memref<1x4x256xf32, #tpu.memory_space<vmem>>, vector<1x4x256xf32>
    %1 = vector.shape_cast %0 : vector<1x4x256xf32> to vector<4x256xf32>
    %c0_2 = arith.constant 0 : index
    %c0_3 = arith.constant 0 : index
    %2 = vector.load %arg3[%c0_2, %c0_3] : memref<32x4xf32, #tpu.memory_space<vmem>>, vector<32x4xf32>
    %cst = arith.constant dense<0.000000e+00> : vector<32x256xf32>
    %3 = tpu.matmul %2, %1, %cst {dimension_numbers = #tpu.dot_dimension_numbers<[1], [0], [0], [1], [0, 0, 1, 1], [], []>} : vector<32x4xf32>, vector<4x256xf32>, vector<32x256xf32> -> vector<32x256xf32>
    %c0_4 = arith.constant 0 : index
    %c0_5 = arith.constant 0 : index
    %4 = vector.load %arg5[%c0_4, %c0_5] : memref<32x1xf32, #tpu.memory_space<vmem>>, vector<32x1xf32>
    %5 = vector.broadcast %4 : vector<32x1xf32> to vector<32x256xf32>
    %6 = arith.addf %3, %5 : vector<32x256xf32>
    %c0_6 = arith.constant 0 : index
    %c0_7 = arith.constant 0 : index
    %7 = vector.load %arg4[%c0_6, %c0_7] : memref<32x4xf32, #tpu.memory_space<vmem>>, vector<32x4xf32>
    %cst_8 = arith.constant dense<0.000000e+00> : vector<32x256xf32>
    %8 = tpu.matmul %7, %1, %cst_8 {dimension_numbers = #tpu.dot_dimension_numbers<[1], [0], [0], [1], [0, 0, 1, 1], [], []>} : vector<32x4xf32>, vector<4x256xf32>, vector<32x256xf32> -> vector<32x256xf32>
    %c0_9 = arith.constant 0 : index
    %c0_10 = arith.constant 0 : index
    %9 = vector.load %arg6[%c0_9, %c0_10] : memref<32x1xf32, #tpu.memory_space<vmem>>, vector<32x1xf32>
    %10 = vector.broadcast %9 : vector<32x1xf32> to vector<32x256xf32>
    %11 = arith.addf %8, %10 : vector<32x256xf32>
    %12 = math.tanh %6 : vector<32x256xf32>
    %13 = arith.negf %11 : vector<32x256xf32>
    %14 = math.exp %13 : vector<32x256xf32>
    %cst_11 = arith.constant 1.000000e+00 : f32
    %15 = vector.broadcast %cst_11 : f32 to vector<32x256xf32>
    %16 = arith.addf %15, %14 : vector<32x256xf32>
    %17 = arith.divf %15, %16 : vector<32x256xf32>
    %c0_12 = arith.constant 0 : index
    %c0_13 = arith.constant 0 : index
    %18 = vector.load %arg9[%c0_12, %c0_13] : memref<32x256xf32, #tpu.memory_space<vmem>>, vector<32x256xf32>
    tpu.vector_store %arg9[%c0_12, %c0_13], %17 {strides = array<i32>} : memref<32x256xf32, #tpu.memory_space<vmem>>, vector<32x256xf32>,
    %cst_14 = arith.constant 1.000000e+00 : f32
    %19 = vector.broadcast %cst_14 : f32 to vector<32x256xf32>
    %20 = arith.subf %19, %17 : vector<32x256xf32>
    %21 = arith.mulf %20, %12 : vector<32x256xf32>
    %c0_15 = arith.constant 0 : index
    %c0_16 = arith.constant 0 : index
    %c0_17 = arith.constant 0 : index
    %22 = vector.load %arg7[%c0_15, %c0_16, %c0_17] : memref<1x32x256xf32, #tpu.memory_space<vmem>>, vector<1x32x256xf32>
    %23 = vector.shape_cast %22 : vector<1x32x256xf32> to vector<32x256xf32>
    %24 = vector.shape_cast %21 : vector<32x256xf32> to vector<1x32x256xf32>
    tpu.vector_store %arg7[%c0_15, %c0_16, %c0_17], %24 {strides = array<i32>} : memref<1x32x256xf32, #tpu.memory_space<vmem>>, vector<1x32x256xf32>,
    %cst_18 = arith.constant 0.000000e+00 : f32
    %25 = vector.broadcast %cst_18 : f32 to vector<32x16xf32>
    %c0_19 = arith.constant 0 : index
    %c0_20 = arith.constant 0 : index
    %26 = vector.load %arg9[%c0_19, %c0_20] : memref<32x256xf32, #tpu.memory_space<vmem>>, vector<32x16xf32>
    %27 = arith.mulf %26, %25 : vector<32x16xf32>
    %c0_21 = arith.constant 0 : index
    %c0_22 = arith.constant 0 : index
    %c0_23 = arith.constant 0 : index
    %28 = vector.load %arg7[%c0_21, %c0_22, %c0_23] : memref<1x32x256xf32, #tpu.memory_space<vmem>>, vector<1x32x16xf32>
    %29 = vector.shape_cast %28 : vector<1x32x16xf32> to vector<32x16xf32>
    %30 = arith.addf %27, %29 : vector<32x16xf32>
    %c0_24 = arith.constant 0 : index
    %c0_25 = arith.constant 0 : index
    %31 = vector.load %arg10[%c0_24, %c0_25] : memref<32x256xf32, #tpu.memory_space<vmem>>, vector<32x16xf32>
    tpu.vector_store %arg10[%c0_24, %c0_25], %30 {strides = array<i32>} : memref<32x256xf32, #tpu.memory_space<vmem>>, vector<32x16xf32>,
    %c0_26 = arith.constant 0 : index
    %c16 = arith.constant 16 : index
    %32 = vector.load %arg9[%c0_26, %c16] : memref<32x256xf32, #tpu.memory_space<vmem>>, vector<32x16xf32>
    %33 = arith.mulf %32, %30 : vector<32x16xf32>
    %c0_27 = arith.constant 0 : index
    %c0_28 = arith.constant 0 : index
    %c16_29 = arith.constant 16 : index
    %34 = vector.load %arg7[%c0_27, %c0_28, %c16_29] : memref<1x32x256xf32, #tpu.memory_space<vmem>>, vector<1x32x16xf32>
    %35 = vector.shape_cast %34 : vector<1x32x16xf32> to vector<32x16xf32>
    %36 = arith.addf %33, %35 : vector<32x16xf32>
    %c0_30 = arith.constant 0 : index
    %c16_31 = arith.constant 16 : index
    %37 = vector.load %arg10[%c0_30, %c16_31] : memref<32x256xf32, #tpu.memory_space<vmem>>, vector<32x16xf32>
    tpu.vector_store %arg10[%c0_30, %c16_31], %36 {strides = array<i32>} : memref<32x256xf32, #tpu.memory_space<vmem>>, vector<32x16xf32>,
    %c0_32 = arith.constant 0 : index
    %c32 = arith.constant 32 : index
    %38 = vector.load %arg9[%c0_32, %c32] : memref<32x256xf32, #tpu.memory_space<vmem>>, vector<32x16xf32>
    %39 = arith.mulf %38, %36 : vector<32x16xf32>
    %c0_33 = arith.constant 0 : index
    %c0_34 = arith.constant 0 : index
    %c32_35 = arith.constant 32 : index
    %40 = vector.load %arg7[%c0_33, %c0_34, %c32_35] : memref<1x32x256xf32, #tpu.memory_space<vmem>>, vector<1x32x16xf32>
    %41 = vector.shape_cast %40 : vector<1x32x16xf32> to vector<32x16xf32>
    %42 = arith.addf %39, %41 : vector<32x16xf32>
    %c0_36 = arith.constant 0 : index
    %c32_37 = arith.constant 32 : index
    %43 = vector.load %arg10[%c0_36, %c32_37] : memref<32x256xf32, #tpu.memory_space<vmem>>, vector<32x16xf32>
    tpu.vector_store %arg10[%c0_36, %c32_37], %42 {strides = array<i32>} : memref<32x256xf32, #tpu.memory_space<vmem>>, vector<32x16xf32>,
    %c0_38 = arith.constant 0 : index
    %c48 = arith.constant 48 : index
    %44 = vector.load %arg9[%c0_38, %c48] : memref<32x256xf32, #tpu.memory_space<vmem>>, vector<32x16xf32>
    %45 = arith.mulf %44, %42 : vector<32x16xf32>
    %c0_39 = arith.constant 0 : index
    %c0_40 = arith.constant 0 : index
    %c48_41 = arith.constant 48 : index
    %46 = vector.load %arg7[%c0_39, %c0_40, %c48_41] : memref<1x32x256xf32, #tpu.memory_space<vmem>>, vector<1x32x16xf32>
    %47 = vector.shape_cast %46 : vector<1x32x16xf32> to vector<32x16xf32>
    %48 = arith.addf %45, %47 : vector<32x16xf32>
    %c0_42 = arith.constant 0 : index
    %c48_43 = arith.constant 48 : index
    %49 = vector.load %arg10[%c0_42, %c48_43] : memref<32x256xf32, #tpu.memory_space<vmem>>, vector<32x16xf32>
    tpu.vector_store %arg10[%c0_42, %c48_43], %48 {strides = array<i32>} : memref<32x256xf32, #tpu.memory_space<vmem>>, vector<32x16xf32>,
    %c0_44 = arith.constant 0 : index
    %c64 = arith.constant 64 : index
    %50 = vector.load %arg9[%c0_44, %c64] : memref<32x256xf32, #tpu.memory_space<vmem>>, vector<32x16xf32>
    %51 = arith.mulf %50, %48 : vector<32x16xf32>
    %c0_45 = arith.constant 0 : index
    %c0_46 = arith.constant 0 : index
    %c64_47 = arith.constant 64 : index
    %52 = vector.load %arg7[%c0_45, %c0_46, %c64_47] : memref<1x32x256xf32, #tpu.memory_space<vmem>>, vector<1x32x16xf32>
    %53 = vector.shape_cast %52 : vector<1x32x16xf32> to vector<32x16xf32>
    %54 = arith.addf %51, %53 : vector<32x16xf32>
    %c0_48 = arith.constant 0 : index
    %c64_49 = arith.constant 64 : index
    %55 = vector.load %arg10[%c0_48, %c64_49] : memref<32x256xf32, #tpu.memory_space<vmem>>, vector<32x16xf32>
    tpu.vector_store %arg10[%c0_48, %c64_49], %54 {strides = array<i32>} : memref<32x256xf32, #tpu.memory_space<vmem>>, vector<32x16xf32>,
    %c0_50 = arith.constant 0 : index
    %c80 = arith.constant 80 : index
    %56 = vector.load %arg9[%c0_50, %c80] : memref<32x256xf32, #tpu.memory_space<vmem>>, vector<32x16xf32>
    %57 = arith.mulf %56, %54 : vector<32x16xf32>
    %c0_51 = arith.constant 0 : index
    %c0_52 = arith.constant 0 : index
    %c80_53 = arith.constant 80 : index
    %58 = vector.load %arg7[%c0_51, %c0_52, %c80_53] : memref<1x32x256xf32, #tpu.memory_space<vmem>>, vector<1x32x16xf32>
    %59 = vector.shape_cast %58 : vector<1x32x16xf32> to vector<32x16xf32>
    %60 = arith.addf %57, %59 : vector<32x16xf32>
    %c0_54 = arith.constant 0 : index
    %c80_55 = arith.constant 80 : index
    %61 = vector.load %arg10[%c0_54, %c80_55] : memref<32x256xf32, #tpu.memory_space<vmem>>, vector<32x16xf32>
    tpu.vector_store %arg10[%c0_54, %c80_55], %60 {strides = array<i32>} : memref<32x256xf32, #tpu.memory_space<vmem>>, vector<32x16xf32>,
    %c0_56 = arith.constant 0 : index
    %c96 = arith.constant 96 : index
    %62 = vector.load %arg9[%c0_56, %c96] : memref<32x256xf32, #tpu.memory_space<vmem>>, vector<32x16xf32>
    %63 = arith.mulf %62, %60 : vector<32x16xf32>
    %c0_57 = arith.constant 0 : index
    %c0_58 = arith.constant 0 : index
    %c96_59 = arith.constant 96 : index
    %64 = vector.load %arg7[%c0_57, %c0_58, %c96_59] : memref<1x32x256xf32, #tpu.memory_space<vmem>>, vector<1x32x16xf32>
    %65 = vector.shape_cast %64 : vector<1x32x16xf32> to vector<32x16xf32>
    %66 = arith.addf %63, %65 : vector<32x16xf32>
    %c0_60 = arith.constant 0 : index
    %c96_61 = arith.constant 96 : index
    %67 = vector.load %arg10[%c0_60, %c96_61] : memref<32x256xf32, #tpu.memory_space<vmem>>, vector<32x16xf32>
    tpu.vector_store %arg10[%c0_60, %c96_61], %66 {strides = array<i32>} : memref<32x256xf32, #tpu.memory_space<vmem>>, vector<32x16xf32>,
    %c0_62 = arith.constant 0 : index
    %c112 = arith.constant 112 : index
    %68 = vector.load %arg9[%c0_62, %c112] : memref<32x256xf32, #tpu.memory_space<vmem>>, vector<32x16xf32>
    %69 = arith.mulf %68, %66 : vector<32x16xf32>
    %c0_63 = arith.constant 0 : index
    %c0_64 = arith.constant 0 : index
    %c112_65 = arith.constant 112 : index
    %70 = vector.load %arg7[%c0_63, %c0_64, %c112_65] : memref<1x32x256xf32, #tpu.memory_space<vmem>>, vector<1x32x16xf32>
    %71 = vector.shape_cast %70 : vector<1x32x16xf32> to vector<32x16xf32>
    %72 = arith.addf %69, %71 : vector<32x16xf32>
    %c0_66 = arith.constant 0 : index
    %c112_67 = arith.constant 112 : index
    %73 = vector.load %arg10[%c0_66, %c112_67] : memref<32x256xf32, #tpu.memory_space<vmem>>, vector<32x16xf32>
    tpu.vector_store %arg10[%c0_66, %c112_67], %72 {strides = array<i32>} : memref<32x256xf32, #tpu.memory_space<vmem>>, vector<32x16xf32>,
    %c0_68 = arith.constant 0 : index
    %c128 = arith.constant 128 : index
    %74 = vector.load %arg9[%c0_68, %c128] : memref<32x256xf32, #tpu.memory_space<vmem>>, vector<32x16xf32>
    %75 = arith.mulf %74, %72 : vector<32x16xf32>
    %c0_69 = arith.constant 0 : index
    %c0_70 = arith.constant 0 : index
    %c128_71 = arith.constant 128 : index
    %76 = vector.load %arg7[%c0_69, %c0_70, %c128_71] : memref<1x32x256xf32, #tpu.memory_space<vmem>>, vector<1x32x16xf32>
    %77 = vector.shape_cast %76 : vector<1x32x16xf32> to vector<32x16xf32>
    %78 = arith.addf %75, %77 : vector<32x16xf32>
    %c0_72 = arith.constant 0 : index
    %c128_73 = arith.constant 128 : index
    %79 = vector.load %arg10[%c0_72, %c128_73] : memref<32x256xf32, #tpu.memory_space<vmem>>, vector<32x16xf32>
    tpu.vector_store %arg10[%c0_72, %c128_73], %78 {strides = array<i32>} : memref<32x256xf32, #tpu.memory_space<vmem>>, vector<32x16xf32>,
    %c0_74 = arith.constant 0 : index
    %c144 = arith.constant 144 : index
    %80 = vector.load %arg9[%c0_74, %c144] : memref<32x256xf32, #tpu.memory_space<vmem>>, vector<32x16xf32>
    %81 = arith.mulf %80, %78 : vector<32x16xf32>
    %c0_75 = arith.constant 0 : index
    %c0_76 = arith.constant 0 : index
    %c144_77 = arith.constant 144 : index
    %82 = vector.load %arg7[%c0_75, %c0_76, %c144_77] : memref<1x32x256xf32, #tpu.memory_space<vmem>>, vector<1x32x16xf32>
    %83 = vector.shape_cast %82 : vector<1x32x16xf32> to vector<32x16xf32>
    %84 = arith.addf %81, %83 : vector<32x16xf32>
    %c0_78 = arith.constant 0 : index
    %c144_79 = arith.constant 144 : index
    %85 = vector.load %arg10[%c0_78, %c144_79] : memref<32x256xf32, #tpu.memory_space<vmem>>, vector<32x16xf32>
    tpu.vector_store %arg10[%c0_78, %c144_79], %84 {strides = array<i32>} : memref<32x256xf32, #tpu.memory_space<vmem>>, vector<32x16xf32>,
    %c0_80 = arith.constant 0 : index
    %c160 = arith.constant 160 : index
    %86 = vector.load %arg9[%c0_80, %c160] : memref<32x256xf32, #tpu.memory_space<vmem>>, vector<32x16xf32>
    %87 = arith.mulf %86, %84 : vector<32x16xf32>
    %c0_81 = arith.constant 0 : index
    %c0_82 = arith.constant 0 : index
    %c160_83 = arith.constant 160 : index
    %88 = vector.load %arg7[%c0_81, %c0_82, %c160_83] : memref<1x32x256xf32, #tpu.memory_space<vmem>>, vector<1x32x16xf32>
    %89 = vector.shape_cast %88 : vector<1x32x16xf32> to vector<32x16xf32>
    %90 = arith.addf %87, %89 : vector<32x16xf32>
    %c0_84 = arith.constant 0 : index
    %c160_85 = arith.constant 160 : index
    %91 = vector.load %arg10[%c0_84, %c160_85] : memref<32x256xf32, #tpu.memory_space<vmem>>, vector<32x16xf32>
    tpu.vector_store %arg10[%c0_84, %c160_85], %90 {strides = array<i32>} : memref<32x256xf32, #tpu.memory_space<vmem>>, vector<32x16xf32>,
    %c0_86 = arith.constant 0 : index
    %c176 = arith.constant 176 : index
    %92 = vector.load %arg9[%c0_86, %c176] : memref<32x256xf32, #tpu.memory_space<vmem>>, vector<32x16xf32>
    %93 = arith.mulf %92, %90 : vector<32x16xf32>
    %c0_87 = arith.constant 0 : index
    %c0_88 = arith.constant 0 : index
    %c176_89 = arith.constant 176 : index
    %94 = vector.load %arg7[%c0_87, %c0_88, %c176_89] : memref<1x32x256xf32, #tpu.memory_space<vmem>>, vector<1x32x16xf32>
    %95 = vector.shape_cast %94 : vector<1x32x16xf32> to vector<32x16xf32>
    %96 = arith.addf %93, %95 : vector<32x16xf32>
    %c0_90 = arith.constant 0 : index
    %c176_91 = arith.constant 176 : index
    %97 = vector.load %arg10[%c0_90, %c176_91] : memref<32x256xf32, #tpu.memory_space<vmem>>, vector<32x16xf32>
    tpu.vector_store %arg10[%c0_90, %c176_91], %96 {strides = array<i32>} : memref<32x256xf32, #tpu.memory_space<vmem>>, vector<32x16xf32>,
    %c0_92 = arith.constant 0 : index
    %c192 = arith.constant 192 : index
    %98 = vector.load %arg9[%c0_92, %c192] : memref<32x256xf32, #tpu.memory_space<vmem>>, vector<32x16xf32>
    %99 = arith.mulf %98, %96 : vector<32x16xf32>
    %c0_93 = arith.constant 0 : index
    %c0_94 = arith.constant 0 : index
    %c192_95 = arith.constant 192 : index
    %100 = vector.load %arg7[%c0_93, %c0_94, %c192_95] : memref<1x32x256xf32, #tpu.memory_space<vmem>>, vector<1x32x16xf32>
    %101 = vector.shape_cast %100 : vector<1x32x16xf32> to vector<32x16xf32>
    %102 = arith.addf %99, %101 : vector<32x16xf32>
    %c0_96 = arith.constant 0 : index
    %c192_97 = arith.constant 192 : index
    %103 = vector.load %arg10[%c0_96, %c192_97] : memref<32x256xf32, #tpu.memory_space<vmem>>, vector<32x16xf32>
    tpu.vector_store %arg10[%c0_96, %c192_97], %102 {strides = array<i32>} : memref<32x256xf32, #tpu.memory_space<vmem>>, vector<32x16xf32>,
    %c0_98 = arith.constant 0 : index
    %c208 = arith.constant 208 : index
    %104 = vector.load %arg9[%c0_98, %c208] : memref<32x256xf32, #tpu.memory_space<vmem>>, vector<32x16xf32>
    %105 = arith.mulf %104, %102 : vector<32x16xf32>
    %c0_99 = arith.constant 0 : index
    %c0_100 = arith.constant 0 : index
    %c208_101 = arith.constant 208 : index
    %106 = vector.load %arg7[%c0_99, %c0_100, %c208_101] : memref<1x32x256xf32, #tpu.memory_space<vmem>>, vector<1x32x16xf32>
    %107 = vector.shape_cast %106 : vector<1x32x16xf32> to vector<32x16xf32>
    %108 = arith.addf %105, %107 : vector<32x16xf32>
    %c0_102 = arith.constant 0 : index
    %c208_103 = arith.constant 208 : index
    %109 = vector.load %arg10[%c0_102, %c208_103] : memref<32x256xf32, #tpu.memory_space<vmem>>, vector<32x16xf32>
    tpu.vector_store %arg10[%c0_102, %c208_103], %108 {strides = array<i32>} : memref<32x256xf32, #tpu.memory_space<vmem>>, vector<32x16xf32>,
    %c0_104 = arith.constant 0 : index
    %c224 = arith.constant 224 : index
    %110 = vector.load %arg9[%c0_104, %c224] : memref<32x256xf32, #tpu.memory_space<vmem>>, vector<32x16xf32>
    %111 = arith.mulf %110, %108 : vector<32x16xf32>
    %c0_105 = arith.constant 0 : index
    %c0_106 = arith.constant 0 : index
    %c224_107 = arith.constant 224 : index
    %112 = vector.load %arg7[%c0_105, %c0_106, %c224_107] : memref<1x32x256xf32, #tpu.memory_space<vmem>>, vector<1x32x16xf32>
    %113 = vector.shape_cast %112 : vector<1x32x16xf32> to vector<32x16xf32>
    %114 = arith.addf %111, %113 : vector<32x16xf32>
    %c0_108 = arith.constant 0 : index
    %c224_109 = arith.constant 224 : index
    %115 = vector.load %arg10[%c0_108, %c224_109] : memref<32x256xf32, #tpu.memory_space<vmem>>, vector<32x16xf32>
    tpu.vector_store %arg10[%c0_108, %c224_109], %114 {strides = array<i32>} : memref<32x256xf32, #tpu.memory_space<vmem>>, vector<32x16xf32>,
    %c0_110 = arith.constant 0 : index
    %c240 = arith.constant 240 : index
    %116 = vector.load %arg9[%c0_110, %c240] : memref<32x256xf32, #tpu.memory_space<vmem>>, vector<32x16xf32>
    %117 = arith.mulf %116, %114 : vector<32x16xf32>
    %c0_111 = arith.constant 0 : index
    %c0_112 = arith.constant 0 : index
    %c240_113 = arith.constant 240 : index
    %118 = vector.load %arg7[%c0_111, %c0_112, %c240_113] : memref<1x32x256xf32, #tpu.memory_space<vmem>>, vector<1x32x16xf32>
    %119 = vector.shape_cast %118 : vector<1x32x16xf32> to vector<32x16xf32>
    %120 = arith.addf %117, %119 : vector<32x16xf32>
    %c0_114 = arith.constant 0 : index
    %c240_115 = arith.constant 240 : index
    %121 = vector.load %arg10[%c0_114, %c240_115] : memref<32x256xf32, #tpu.memory_space<vmem>>, vector<32x16xf32>
    tpu.vector_store %arg10[%c0_114, %c240_115], %120 {strides = array<i32>} : memref<32x256xf32, #tpu.memory_space<vmem>>, vector<32x16xf32>,
    %c0_116 = arith.constant 0 : index
    %c240_117 = arith.constant 240 : index
    %122 = vector.load %arg9[%c0_116, %c240_117] : memref<32x256xf32, #tpu.memory_space<vmem>>, vector<32x16xf32>
    %123 = arith.mulf %122, %25 : vector<32x16xf32>
    %c0_118 = arith.constant 0 : index
    %c0_119 = arith.constant 0 : index
    %c240_120 = arith.constant 240 : index
    %124 = vector.load %arg7[%c0_118, %c0_119, %c240_120] : memref<1x32x256xf32, #tpu.memory_space<vmem>>, vector<1x32x16xf32>
    %125 = vector.shape_cast %124 : vector<1x32x16xf32> to vector<32x16xf32>
    %126 = arith.addf %123, %125 : vector<32x16xf32>
    %c0_121 = arith.constant 0 : index
    %c240_122 = arith.constant 240 : index
    %127 = vector.load %arg10[%c0_121, %c240_122] : memref<32x256xf32, #tpu.memory_space<vmem>>, vector<32x16xf32>
    %128 = arith.addf %127, %126 : vector<32x16xf32>
    %c0_123 = arith.constant 0 : index
    %c0_124 = arith.constant 0 : index
    %c240_125 = arith.constant 240 : index
    %129 = vector.load %arg8[%c0_123, %c0_124, %c240_125] : memref<1x32x256xf32, #tpu.memory_space<vmem>>, vector<1x32x16xf32>
    %130 = vector.shape_cast %129 : vector<1x32x16xf32> to vector<32x16xf32>
    %131 = vector.shape_cast %128 : vector<32x16xf32> to vector<1x32x16xf32>
    tpu.vector_store %arg8[%c0_123, %c0_124, %c240_125], %131 {strides = array<i32>} : memref<1x32x256xf32, #tpu.memory_space<vmem>>, vector<1x32x16xf32>,
    %c0_126 = arith.constant 0 : index
    %c224_127 = arith.constant 224 : index
    %132 = vector.load %arg9[%c0_126, %c224_127] : memref<32x256xf32, #tpu.memory_space<vmem>>, vector<32x16xf32>
    %133 = arith.mulf %132, %126 : vector<32x16xf32>
    %c0_128 = arith.constant 0 : index
    %c0_129 = arith.constant 0 : index
    %c224_130 = arith.constant 224 : index
    %134 = vector.load %arg7[%c0_128, %c0_129, %c224_130] : memref<1x32x256xf32, #tpu.memory_space<vmem>>, vector<1x32x16xf32>
    %135 = vector.shape_cast %134 : vector<1x32x16xf32> to vector<32x16xf32>
    %136 = arith.addf %133, %135 : vector<32x16xf32>
    %c0_131 = arith.constant 0 : index
    %c224_132 = arith.constant 224 : index
    %137 = vector.load %arg10[%c0_131, %c224_132] : memref<32x256xf32, #tpu.memory_space<vmem>>, vector<32x16xf32>
    %138 = arith.addf %137, %136 : vector<32x16xf32>
    %c0_133 = arith.constant 0 : index
    %c0_134 = arith.constant 0 : index
    %c224_135 = arith.constant 224 : index
    %139 = vector.load %arg8[%c0_133, %c0_134, %c224_135] : memref<1x32x256xf32, #tpu.memory_space<vmem>>, vector<1x32x16xf32>
    %140 = vector.shape_cast %139 : vector<1x32x16xf32> to vector<32x16xf32>
    %141 = vector.shape_cast %138 : vector<32x16xf32> to vector<1x32x16xf32>
    tpu.vector_store %arg8[%c0_133, %c0_134, %c224_135], %141 {strides = array<i32>} : memref<1x32x256xf32, #tpu.memory_space<vmem>>, vector<1x32x16xf32>,
    %c0_136 = arith.constant 0 : index
    %c208_137 = arith.constant 208 : index
    %142 = vector.load %arg9[%c0_136, %c208_137] : memref<32x256xf32, #tpu.memory_space<vmem>>, vector<32x16xf32>
    %143 = arith.mulf %142, %136 : vector<32x16xf32>
    %c0_138 = arith.constant 0 : index
    %c0_139 = arith.constant 0 : index
    %c208_140 = arith.constant 208 : index
    %144 = vector.load %arg7[%c0_138, %c0_139, %c208_140] : memref<1x32x256xf32, #tpu.memory_space<vmem>>, vector<1x32x16xf32>
    %145 = vector.shape_cast %144 : vector<1x32x16xf32> to vector<32x16xf32>
    %146 = arith.addf %143, %145 : vector<32x16xf32>
    %c0_141 = arith.constant 0 : index
    %c208_142 = arith.constant 208 : index
    %147 = vector.load %arg10[%c0_141, %c208_142] : memref<32x256xf32, #tpu.memory_space<vmem>>, vector<32x16xf32>
    %148 = arith.addf %147, %146 : vector<32x16xf32>
    %c0_143 = arith.constant 0 : index
    %c0_144 = arith.constant 0 : index
    %c208_145 = arith.constant 208 : index
    %149 = vector.load %arg8[%c0_143, %c0_144, %c208_145] : memref<1x32x256xf32, #tpu.memory_space<vmem>>, vector<1x32x16xf32>
    %150 = vector.shape_cast %149 : vector<1x32x16xf32> to vector<32x16xf32>
    %151 = vector.shape_cast %148 : vector<32x16xf32> to vector<1x32x16xf32>
    tpu.vector_store %arg8[%c0_143, %c0_144, %c208_145], %151 {strides = array<i32>} : memref<1x32x256xf32, #tpu.memory_space<vmem>>, vector<1x32x16xf32>,
    %c0_146 = arith.constant 0 : index
    %c192_147 = arith.constant 192 : index
    %152 = vector.load %arg9[%c0_146, %c192_147] : memref<32x256xf32, #tpu.memory_space<vmem>>, vector<32x16xf32>
    %153 = arith.mulf %152, %146 : vector<32x16xf32>
    %c0_148 = arith.constant 0 : index
    %c0_149 = arith.constant 0 : index
    %c192_150 = arith.constant 192 : index
    %154 = vector.load %arg7[%c0_148, %c0_149, %c192_150] : memref<1x32x256xf32, #tpu.memory_space<vmem>>, vector<1x32x16xf32>
    %155 = vector.shape_cast %154 : vector<1x32x16xf32> to vector<32x16xf32>
    %156 = arith.addf %153, %155 : vector<32x16xf32>
    %c0_151 = arith.constant 0 : index
    %c192_152 = arith.constant 192 : index
    %157 = vector.load %arg10[%c0_151, %c192_152] : memref<32x256xf32, #tpu.memory_space<vmem>>, vector<32x16xf32>
    %158 = arith.addf %157, %156 : vector<32x16xf32>
    %c0_153 = arith.constant 0 : index
    %c0_154 = arith.constant 0 : index
    %c192_155 = arith.constant 192 : index
    %159 = vector.load %arg8[%c0_153, %c0_154, %c192_155] : memref<1x32x256xf32, #tpu.memory_space<vmem>>, vector<1x32x16xf32>
    %160 = vector.shape_cast %159 : vector<1x32x16xf32> to vector<32x16xf32>
    %161 = vector.shape_cast %158 : vector<32x16xf32> to vector<1x32x16xf32>
    tpu.vector_store %arg8[%c0_153, %c0_154, %c192_155], %161 {strides = array<i32>} : memref<1x32x256xf32, #tpu.memory_space<vmem>>, vector<1x32x16xf32>,
    %c0_156 = arith.constant 0 : index
    %c176_157 = arith.constant 176 : index
    %162 = vector.load %arg9[%c0_156, %c176_157] : memref<32x256xf32, #tpu.memory_space<vmem>>, vector<32x16xf32>
    %163 = arith.mulf %162, %156 : vector<32x16xf32>
    %c0_158 = arith.constant 0 : index
    %c0_159 = arith.constant 0 : index
    %c176_160 = arith.constant 176 : index
    %164 = vector.load %arg7[%c0_158, %c0_159, %c176_160] : memref<1x32x256xf32, #tpu.memory_space<vmem>>, vector<1x32x16xf32>
    %165 = vector.shape_cast %164 : vector<1x32x16xf32> to vector<32x16xf32>
    %166 = arith.addf %163, %165 : vector<32x16xf32>
    %c0_161 = arith.constant 0 : index
    %c176_162 = arith.constant 176 : index
    %167 = vector.load %arg10[%c0_161, %c176_162] : memref<32x256xf32, #tpu.memory_space<vmem>>, vector<32x16xf32>
    %168 = arith.addf %167, %166 : vector<32x16xf32>
    %c0_163 = arith.constant 0 : index
    %c0_164 = arith.constant 0 : index
    %c176_165 = arith.constant 176 : index
    %169 = vector.load %arg8[%c0_163, %c0_164, %c176_165] : memref<1x32x256xf32, #tpu.memory_space<vmem>>, vector<1x32x16xf32>
    %170 = vector.shape_cast %169 : vector<1x32x16xf32> to vector<32x16xf32>
    %171 = vector.shape_cast %168 : vector<32x16xf32> to vector<1x32x16xf32>
    tpu.vector_store %arg8[%c0_163, %c0_164, %c176_165], %171 {strides = array<i32>} : memref<1x32x256xf32, #tpu.memory_space<vmem>>, vector<1x32x16xf32>,
    %c0_166 = arith.constant 0 : index
    %c160_167 = arith.constant 160 : index
    %172 = vector.load %arg9[%c0_166, %c160_167] : memref<32x256xf32, #tpu.memory_space<vmem>>, vector<32x16xf32>
    %173 = arith.mulf %172, %166 : vector<32x16xf32>
    %c0_168 = arith.constant 0 : index
    %c0_169 = arith.constant 0 : index
    %c160_170 = arith.constant 160 : index
    %174 = vector.load %arg7[%c0_168, %c0_169, %c160_170] : memref<1x32x256xf32, #tpu.memory_space<vmem>>, vector<1x32x16xf32>
    %175 = vector.shape_cast %174 : vector<1x32x16xf32> to vector<32x16xf32>
    %176 = arith.addf %173, %175 : vector<32x16xf32>
    %c0_171 = arith.constant 0 : index
    %c160_172 = arith.constant 160 : index
    %177 = vector.load %arg10[%c0_171, %c160_172] : memref<32x256xf32, #tpu.memory_space<vmem>>, vector<32x16xf32>
    %178 = arith.addf %177, %176 : vector<32x16xf32>
    %c0_173 = arith.constant 0 : index
    %c0_174 = arith.constant 0 : index
    %c160_175 = arith.constant 160 : index
    %179 = vector.load %arg8[%c0_173, %c0_174, %c160_175] : memref<1x32x256xf32, #tpu.memory_space<vmem>>, vector<1x32x16xf32>
    %180 = vector.shape_cast %179 : vector<1x32x16xf32> to vector<32x16xf32>
    %181 = vector.shape_cast %178 : vector<32x16xf32> to vector<1x32x16xf32>
    tpu.vector_store %arg8[%c0_173, %c0_174, %c160_175], %181 {strides = array<i32>} : memref<1x32x256xf32, #tpu.memory_space<vmem>>, vector<1x32x16xf32>,
    %c0_176 = arith.constant 0 : index
    %c144_177 = arith.constant 144 : index
    %182 = vector.load %arg9[%c0_176, %c144_177] : memref<32x256xf32, #tpu.memory_space<vmem>>, vector<32x16xf32>
    %183 = arith.mulf %182, %176 : vector<32x16xf32>
    %c0_178 = arith.constant 0 : index
    %c0_179 = arith.constant 0 : index
    %c144_180 = arith.constant 144 : index
    %184 = vector.load %arg7[%c0_178, %c0_179, %c144_180] : memref<1x32x256xf32, #tpu.memory_space<vmem>>, vector<1x32x16xf32>
    %185 = vector.shape_cast %184 : vector<1x32x16xf32> to vector<32x16xf32>
    %186 = arith.addf %183, %185 : vector<32x16xf32>
    %c0_181 = arith.constant 0 : index
    %c144_182 = arith.constant 144 : index
    %187 = vector.load %arg10[%c0_181, %c144_182] : memref<32x256xf32, #tpu.memory_space<vmem>>, vector<32x16xf32>
    %188 = arith.addf %187, %186 : vector<32x16xf32>
    %c0_183 = arith.constant 0 : index
    %c0_184 = arith.constant 0 : index
    %c144_185 = arith.constant 144 : index
    %189 = vector.load %arg8[%c0_183, %c0_184, %c144_185] : memref<1x32x256xf32, #tpu.memory_space<vmem>>, vector<1x32x16xf32>
    %190 = vector.shape_cast %189 : vector<1x32x16xf32> to vector<32x16xf32>
    %191 = vector.shape_cast %188 : vector<32x16xf32> to vector<1x32x16xf32>
    tpu.vector_store %arg8[%c0_183, %c0_184, %c144_185], %191 {strides = array<i32>} : memref<1x32x256xf32, #tpu.memory_space<vmem>>, vector<1x32x16xf32>,
    %c0_186 = arith.constant 0 : index
    %c128_187 = arith.constant 128 : index
    %192 = vector.load %arg9[%c0_186, %c128_187] : memref<32x256xf32, #tpu.memory_space<vmem>>, vector<32x16xf32>
    %193 = arith.mulf %192, %186 : vector<32x16xf32>
    %c0_188 = arith.constant 0 : index
    %c0_189 = arith.constant 0 : index
    %c128_190 = arith.constant 128 : index
    %194 = vector.load %arg7[%c0_188, %c0_189, %c128_190] : memref<1x32x256xf32, #tpu.memory_space<vmem>>, vector<1x32x16xf32>
    %195 = vector.shape_cast %194 : vector<1x32x16xf32> to vector<32x16xf32>
    %196 = arith.addf %193, %195 : vector<32x16xf32>
    %c0_191 = arith.constant 0 : index
    %c128_192 = arith.constant 128 : index
    %197 = vector.load %arg10[%c0_191, %c128_192] : memref<32x256xf32, #tpu.memory_space<vmem>>, vector<32x16xf32>
    %198 = arith.addf %197, %196 : vector<32x16xf32>
    %c0_193 = arith.constant 0 : index
    %c0_194 = arith.constant 0 : index
    %c128_195 = arith.constant 128 : index
    %199 = vector.load %arg8[%c0_193, %c0_194, %c128_195] : memref<1x32x256xf32, #tpu.memory_space<vmem>>, vector<1x32x16xf32>
    %200 = vector.shape_cast %199 : vector<1x32x16xf32> to vector<32x16xf32>
    %201 = vector.shape_cast %198 : vector<32x16xf32> to vector<1x32x16xf32>
    tpu.vector_store %arg8[%c0_193, %c0_194, %c128_195], %201 {strides = array<i32>} : memref<1x32x256xf32, #tpu.memory_space<vmem>>, vector<1x32x16xf32>,
    %c0_196 = arith.constant 0 : index
    %c112_197 = arith.constant 112 : index
    %202 = vector.load %arg9[%c0_196, %c112_197] : memref<32x256xf32, #tpu.memory_space<vmem>>, vector<32x16xf32>
    %203 = arith.mulf %202, %196 : vector<32x16xf32>
    %c0_198 = arith.constant 0 : index
    %c0_199 = arith.constant 0 : index
    %c112_200 = arith.constant 112 : index
    %204 = vector.load %arg7[%c0_198, %c0_199, %c112_200] : memref<1x32x256xf32, #tpu.memory_space<vmem>>, vector<1x32x16xf32>
    %205 = vector.shape_cast %204 : vector<1x32x16xf32> to vector<32x16xf32>
    %206 = arith.addf %203, %205 : vector<32x16xf32>
    %c0_201 = arith.constant 0 : index
    %c112_202 = arith.constant 112 : index
    %207 = vector.load %arg10[%c0_201, %c112_202] : memref<32x256xf32, #tpu.memory_space<vmem>>, vector<32x16xf32>
    %208 = arith.addf %207, %206 : vector<32x16xf32>
    %c0_203 = arith.constant 0 : index
    %c0_204 = arith.constant 0 : index
    %c112_205 = arith.constant 112 : index
    %209 = vector.load %arg8[%c0_203, %c0_204, %c112_205] : memref<1x32x256xf32, #tpu.memory_space<vmem>>, vector<1x32x16xf32>
    %210 = vector.shape_cast %209 : vector<1x32x16xf32> to vector<32x16xf32>
    %211 = vector.shape_cast %208 : vector<32x16xf32> to vector<1x32x16xf32>
    tpu.vector_store %arg8[%c0_203, %c0_204, %c112_205], %211 {strides = array<i32>} : memref<1x32x256xf32, #tpu.memory_space<vmem>>, vector<1x32x16xf32>,
    %c0_206 = arith.constant 0 : index
    %c96_207 = arith.constant 96 : index
    %212 = vector.load %arg9[%c0_206, %c96_207] : memref<32x256xf32, #tpu.memory_space<vmem>>, vector<32x16xf32>
    %213 = arith.mulf %212, %206 : vector<32x16xf32>
    %c0_208 = arith.constant 0 : index
    %c0_209 = arith.constant 0 : index
    %c96_210 = arith.constant 96 : index
    %214 = vector.load %arg7[%c0_208, %c0_209, %c96_210] : memref<1x32x256xf32, #tpu.memory_space<vmem>>, vector<1x32x16xf32>
    %215 = vector.shape_cast %214 : vector<1x32x16xf32> to vector<32x16xf32>
    %216 = arith.addf %213, %215 : vector<32x16xf32>
    %c0_211 = arith.constant 0 : index
    %c96_212 = arith.constant 96 : index
    %217 = vector.load %arg10[%c0_211, %c96_212] : memref<32x256xf32, #tpu.memory_space<vmem>>, vector<32x16xf32>
    %218 = arith.addf %217, %216 : vector<32x16xf32>
    %c0_213 = arith.constant 0 : index
    %c0_214 = arith.constant 0 : index
    %c96_215 = arith.constant 96 : index
    %219 = vector.load %arg8[%c0_213, %c0_214, %c96_215] : memref<1x32x256xf32, #tpu.memory_space<vmem>>, vector<1x32x16xf32>
    %220 = vector.shape_cast %219 : vector<1x32x16xf32> to vector<32x16xf32>
    %221 = vector.shape_cast %218 : vector<32x16xf32> to vector<1x32x16xf32>
    tpu.vector_store %arg8[%c0_213, %c0_214, %c96_215], %221 {strides = array<i32>} : memref<1x32x256xf32, #tpu.memory_space<vmem>>, vector<1x32x16xf32>,
    %c0_216 = arith.constant 0 : index
    %c80_217 = arith.constant 80 : index
    %222 = vector.load %arg9[%c0_216, %c80_217] : memref<32x256xf32, #tpu.memory_space<vmem>>, vector<32x16xf32>
    %223 = arith.mulf %222, %216 : vector<32x16xf32>
    %c0_218 = arith.constant 0 : index
    %c0_219 = arith.constant 0 : index
    %c80_220 = arith.constant 80 : index
    %224 = vector.load %arg7[%c0_218, %c0_219, %c80_220] : memref<1x32x256xf32, #tpu.memory_space<vmem>>, vector<1x32x16xf32>
    %225 = vector.shape_cast %224 : vector<1x32x16xf32> to vector<32x16xf32>
    %226 = arith.addf %223, %225 : vector<32x16xf32>
    %c0_221 = arith.constant 0 : index
    %c80_222 = arith.constant 80 : index
    %227 = vector.load %arg10[%c0_221, %c80_222] : memref<32x256xf32, #tpu.memory_space<vmem>>, vector<32x16xf32>
    %228 = arith.addf %227, %226 : vector<32x16xf32>
    %c0_223 = arith.constant 0 : index
    %c0_224 = arith.constant 0 : index
    %c80_225 = arith.constant 80 : index
    %229 = vector.load %arg8[%c0_223, %c0_224, %c80_225] : memref<1x32x256xf32, #tpu.memory_space<vmem>>, vector<1x32x16xf32>
    %230 = vector.shape_cast %229 : vector<1x32x16xf32> to vector<32x16xf32>
    %231 = vector.shape_cast %228 : vector<32x16xf32> to vector<1x32x16xf32>
    tpu.vector_store %arg8[%c0_223, %c0_224, %c80_225], %231 {strides = array<i32>} : memref<1x32x256xf32, #tpu.memory_space<vmem>>, vector<1x32x16xf32>,
    %c0_226 = arith.constant 0 : index
    %c64_227 = arith.constant 64 : index
    %232 = vector.load %arg9[%c0_226, %c64_227] : memref<32x256xf32, #tpu.memory_space<vmem>>, vector<32x16xf32>
    %233 = arith.mulf %232, %226 : vector<32x16xf32>
    %c0_228 = arith.constant 0 : index
    %c0_229 = arith.constant 0 : index
    %c64_230 = arith.constant 64 : index
    %234 = vector.load %arg7[%c0_228, %c0_229, %c64_230] : memref<1x32x256xf32, #tpu.memory_space<vmem>>, vector<1x32x16xf32>
    %235 = vector.shape_cast %234 : vector<1x32x16xf32> to vector<32x16xf32>
    %236 = arith.addf %233, %235 : vector<32x16xf32>
    %c0_231 = arith.constant 0 : index
    %c64_232 = arith.constant 64 : index
    %237 = vector.load %arg10[%c0_231, %c64_232] : memref<32x256xf32, #tpu.memory_space<vmem>>, vector<32x16xf32>
    %238 = arith.addf %237, %236 : vector<32x16xf32>
    %c0_233 = arith.constant 0 : index
    %c0_234 = arith.constant 0 : index
    %c64_235 = arith.constant 64 : index
    %239 = vector.load %arg8[%c0_233, %c0_234, %c64_235] : memref<1x32x256xf32, #tpu.memory_space<vmem>>, vector<1x32x16xf32>
    %240 = vector.shape_cast %239 : vector<1x32x16xf32> to vector<32x16xf32>
    %241 = vector.shape_cast %238 : vector<32x16xf32> to vector<1x32x16xf32>
    tpu.vector_store %arg8[%c0_233, %c0_234, %c64_235], %241 {strides = array<i32>} : memref<1x32x256xf32, #tpu.memory_space<vmem>>, vector<1x32x16xf32>,
    %c0_236 = arith.constant 0 : index
    %c48_237 = arith.constant 48 : index
    %242 = vector.load %arg9[%c0_236, %c48_237] : memref<32x256xf32, #tpu.memory_space<vmem>>, vector<32x16xf32>
    %243 = arith.mulf %242, %236 : vector<32x16xf32>
    %c0_238 = arith.constant 0 : index
    %c0_239 = arith.constant 0 : index
    %c48_240 = arith.constant 48 : index
    %244 = vector.load %arg7[%c0_238, %c0_239, %c48_240] : memref<1x32x256xf32, #tpu.memory_space<vmem>>, vector<1x32x16xf32>
    %245 = vector.shape_cast %244 : vector<1x32x16xf32> to vector<32x16xf32>
    %246 = arith.addf %243, %245 : vector<32x16xf32>
    %c0_241 = arith.constant 0 : index
    %c48_242 = arith.constant 48 : index
    %247 = vector.load %arg10[%c0_241, %c48_242] : memref<32x256xf32, #tpu.memory_space<vmem>>, vector<32x16xf32>
    %248 = arith.addf %247, %246 : vector<32x16xf32>
    %c0_243 = arith.constant 0 : index
    %c0_244 = arith.constant 0 : index
    %c48_245 = arith.constant 48 : index
    %249 = vector.load %arg8[%c0_243, %c0_244, %c48_245] : memref<1x32x256xf32, #tpu.memory_space<vmem>>, vector<1x32x16xf32>
    %250 = vector.shape_cast %249 : vector<1x32x16xf32> to vector<32x16xf32>
    %251 = vector.shape_cast %248 : vector<32x16xf32> to vector<1x32x16xf32>
    tpu.vector_store %arg8[%c0_243, %c0_244, %c48_245], %251 {strides = array<i32>} : memref<1x32x256xf32, #tpu.memory_space<vmem>>, vector<1x32x16xf32>,
    %c0_246 = arith.constant 0 : index
    %c32_247 = arith.constant 32 : index
    %252 = vector.load %arg9[%c0_246, %c32_247] : memref<32x256xf32, #tpu.memory_space<vmem>>, vector<32x16xf32>
    %253 = arith.mulf %252, %246 : vector<32x16xf32>
    %c0_248 = arith.constant 0 : index
    %c0_249 = arith.constant 0 : index
    %c32_250 = arith.constant 32 : index
    %254 = vector.load %arg7[%c0_248, %c0_249, %c32_250] : memref<1x32x256xf32, #tpu.memory_space<vmem>>, vector<1x32x16xf32>
    %255 = vector.shape_cast %254 : vector<1x32x16xf32> to vector<32x16xf32>
    %256 = arith.addf %253, %255 : vector<32x16xf32>
    %c0_251 = arith.constant 0 : index
    %c32_252 = arith.constant 32 : index
    %257 = vector.load %arg10[%c0_251, %c32_252] : memref<32x256xf32, #tpu.memory_space<vmem>>, vector<32x16xf32>
    %258 = arith.addf %257, %256 : vector<32x16xf32>
    %c0_253 = arith.constant 0 : index
    %c0_254 = arith.constant 0 : index
    %c32_255 = arith.constant 32 : index
    %259 = vector.load %arg8[%c0_253, %c0_254, %c32_255] : memref<1x32x256xf32, #tpu.memory_space<vmem>>, vector<1x32x16xf32>
    %260 = vector.shape_cast %259 : vector<1x32x16xf32> to vector<32x16xf32>
    %261 = vector.shape_cast %258 : vector<32x16xf32> to vector<1x32x16xf32>
    tpu.vector_store %arg8[%c0_253, %c0_254, %c32_255], %261 {strides = array<i32>} : memref<1x32x256xf32, #tpu.memory_space<vmem>>, vector<1x32x16xf32>,
    %c0_256 = arith.constant 0 : index
    %c16_257 = arith.constant 16 : index
    %262 = vector.load %arg9[%c0_256, %c16_257] : memref<32x256xf32, #tpu.memory_space<vmem>>, vector<32x16xf32>
    %263 = arith.mulf %262, %256 : vector<32x16xf32>
    %c0_258 = arith.constant 0 : index
    %c0_259 = arith.constant 0 : index
    %c16_260 = arith.constant 16 : index
    %264 = vector.load %arg7[%c0_258, %c0_259, %c16_260] : memref<1x32x256xf32, #tpu.memory_space<vmem>>, vector<1x32x16xf32>
    %265 = vector.shape_cast %264 : vector<1x32x16xf32> to vector<32x16xf32>
    %266 = arith.addf %263, %265 : vector<32x16xf32>
    %c0_261 = arith.constant 0 : index
    %c16_262 = arith.constant 16 : index
    %267 = vector.load %arg10[%c0_261, %c16_262] : memref<32x256xf32, #tpu.memory_space<vmem>>, vector<32x16xf32>
    %268 = arith.addf %267, %266 : vector<32x16xf32>
    %c0_263 = arith.constant 0 : index
    %c0_264 = arith.constant 0 : index
    %c16_265 = arith.constant 16 : index
    %269 = vector.load %arg8[%c0_263, %c0_264, %c16_265] : memref<1x32x256xf32, #tpu.memory_space<vmem>>, vector<1x32x16xf32>
    %270 = vector.shape_cast %269 : vector<1x32x16xf32> to vector<32x16xf32>
    %271 = vector.shape_cast %268 : vector<32x16xf32> to vector<1x32x16xf32>
    tpu.vector_store %arg8[%c0_263, %c0_264, %c16_265], %271 {strides = array<i32>} : memref<1x32x256xf32, #tpu.memory_space<vmem>>, vector<1x32x16xf32>,
    %c0_266 = arith.constant 0 : index
    %c0_267 = arith.constant 0 : index
    %272 = vector.load %arg9[%c0_266, %c0_267] : memref<32x256xf32, #tpu.memory_space<vmem>>, vector<32x16xf32>
    %273 = arith.mulf %272, %266 : vector<32x16xf32>
    %c0_268 = arith.constant 0 : index
    %c0_269 = arith.constant 0 : index
    %c0_270 = arith.constant 0 : index
    %274 = vector.load %arg7[%c0_268, %c0_269, %c0_270] : memref<1x32x256xf32, #tpu.memory_space<vmem>>, vector<1x32x16xf32>
    %275 = vector.shape_cast %274 : vector<1x32x16xf32> to vector<32x16xf32>
    %276 = arith.addf %273, %275 : vector<32x16xf32>
    %c0_271 = arith.constant 0 : index
    %c0_272 = arith.constant 0 : index
    %277 = vector.load %arg10[%c0_271, %c0_272] : memref<32x256xf32, #tpu.memory_space<vmem>>, vector<32x16xf32>
    %278 = arith.addf %277, %276 : vector<32x16xf32>
    %c0_273 = arith.constant 0 : index
    %c0_274 = arith.constant 0 : index
    %c0_275 = arith.constant 0 : index
    %279 = vector.load %arg8[%c0_273, %c0_274, %c0_275] : memref<1x32x256xf32, #tpu.memory_space<vmem>>, vector<1x32x16xf32>
    %280 = vector.shape_cast %279 : vector<1x32x16xf32> to vector<32x16xf32>
    %281 = vector.shape_cast %278 : vector<32x16xf32> to vector<1x32x16xf32>
    tpu.vector_store %arg8[%c0_273, %c0_274, %c0_275], %281 {strides = array<i32>} : memref<1x32x256xf32, #tpu.memory_space<vmem>>, vector<1x32x16xf32>,
    return
  }
  func.func @transform_0(%arg0: i32, %arg1: i32) -> (i32, i32, i32) {
    %c0_i32 = arith.constant 0 : i32
    %c0_i32_0 = arith.constant 0 : i32
    %c0_i32_1 = arith.constant 0 : i32
    return %arg0, %c0_i32, %c0_i32_0 : i32, i32, i32
  }
  func.func @transform_1(%arg0: i32, %arg1: i32) -> (i32, i32) {
    %c0_i32 = arith.constant 0 : i32
    %c0_i32_0 = arith.constant 0 : i32
    return %arg1, %c0_i32 : i32, i32
  }
  func.func @transform_2(%arg0: i32, %arg1: i32) -> (i32, i32) {
    %c0_i32 = arith.constant 0 : i32
    %c0_i32_0 = arith.constant 0 : i32
    return %arg1, %c0_i32 : i32, i32
  }
  func.func @transform_3(%arg0: i32, %arg1: i32) -> (i32, i32) {
    %c0_i32 = arith.constant 0 : i32
    %c0_i32_0 = arith.constant 0 : i32
    return %arg1, %c0_i32 : i32, i32
  }
  func.func @transform_4(%arg0: i32, %arg1: i32) -> (i32, i32) {
    %c0_i32 = arith.constant 0 : i32
    %c0_i32_0 = arith.constant 0 : i32
    return %arg1, %c0_i32 : i32, i32
  }
  func.func @transform_5(%arg0: i32, %arg1: i32) -> (i32, i32, i32) {
    %c0_i32 = arith.constant 0 : i32
    %c0_i32_0 = arith.constant 0 : i32
    return %arg0, %arg1, %c0_i32 : i32, i32, i32
  }
  func.func @transform_6(%arg0: i32, %arg1: i32) -> (i32, i32, i32) {
    %c0_i32 = arith.constant 0 : i32
    %c0_i32_0 = arith.constant 0 : i32
    return %arg0, %arg1, %c0_i32 : i32, i32, i32
  }
}

</mosaic_0001>

<llo_original>
// kernel: tpu_custom_call.1
$region0: #{tpu_custom_call.1}
  #allocation0 [shape = 'u32[]', space=smem, size = 0x4, offset = 0x4, fixed_abs, tag = 'smem constant byte address 0x4 - core index']
  #allocation1 [shape = 'u32[72,128]{1,0:T(1,128)}', space=vmem, size = 0x9000, scoped, tag = 'internal scratch']
  #allocation2 [shape = 'f32[32,256]{1,0:T(8,128)}', space=vmem, size = 0x8000, scoped, tag = 'scratch operand']
  #allocation3 [shape = 'f32[32,256]{1,0:T(8,128)}', space=vmem, size = 0x8000, scoped, tag = 'scratch operand']
  %s0 = inlined_call_operand.vmem [shape: f32[2,4,256], index: 0, kind: input, shape index: {}]
  %s1 = inlined_call_operand.vmem [shape: f32[32,4], index: 1, kind: input, shape index: {}]
  %s2 = inlined_call_operand.vmem [shape: f32[32,4], index: 2, kind: input, shape index: {}]
  %s3 = inlined_call_operand.vmem [shape: f32[32,1], index: 3, kind: input, shape index: {}]
  %s4 = inlined_call_operand.vmem [shape: f32[32,1], index: 4, kind: input, shape index: {}]
  %s5 = inlined_call_operand.hbm [shape: f32[2,32,256], index: 5, kind: output, shape index: {0}]
  %s6 = inlined_call_operand.hbm [shape: f32[2,32,256], index: 6, kind: output, shape index: {1}]
  %7 = xla_tuple %s5, %s6
  %s8 = sld [smem:[#allocation0]]
  $region61: #{tpu_custom_call.1} parent=0
    _
  %s10 = ssub.s32 1, %s8
  %s11 = scalar_select 0, %s10, %s8
  $region1: #{tpu_custom_call.1} parent=0
    #allocation4 [shape = 'u8[65536]{0}', space=vmem, size = 0x10000, scoped, tag = 'output window, operand 0']
    #allocation5 [shape = 's32[2]{0}', space=sflag, size = 0x8, scoped, tag = 'scoped memory for tpu_custom_call.1']
    #allocation6 [shape = 'u8[65536]{0}', space=vmem, size = 0x10000, scoped, tag = 'output window, operand 1']
    #allocation7 [shape = 's32[2]{0}', space=sflag, size = 0x8, scoped, tag = 'scoped memory for tpu_custom_call.1']
    %12 = vsyncpa [#allocation5], 0
    %s13 = scalar_lea.sflag [#allocation5], 1
    %14 = vsyncpa %s13, 0
    %15 = vsyncpa [#allocation7], 0
    %s16 = scalar_lea.sflag [#allocation7], 1
    %17 = vsyncpa %s16, 0
    loop: start=0, step=1, limit=4
    $region2: #{tpu_custom_call.1} parent=1 // loop_pre_header
      _
    $region3: #{tpu_custom_call.1} parent=1 // loop_header
      %s19 = sphi 0, %s23
      %p20 = scmp.ge.s32.totalorder %s19, 4
      %s26 = sphi 0, %s38
      %s27 = sphi 0, %s34
      %s28 = sphi 0, %s26
      %s29 = sphi 0, %s27
      %s30 = sphi 0, %s28
      %s31 = sphi 0, %s29
      %s41 = sphi 0, %s43
      %s44 = sphi 0, %s41
      %s45 = sphi 0, %s44
      %s61 = sphi 0, %s45
      %s67 = sphi 0, %s69
      %s70 = sphi 0, %s67
      %s71 = sphi 0, %s70
      %s87 = sphi 0, %s71
      %s93 = sphi 0, %s95
      %s96 = sphi 0, %s93
      %s97 = sphi 0, %s96
      %s113 = sphi 0, %s97
      %s119 = sphi 0, %s121
      %s122 = sphi 0, %s119
      %s123 = sphi 0, %s122
      %s139 = sphi 0, %s123
      %s145 = sphi 0, %s147
      %s148 = sphi 0, %s145
      %s149 = sphi 0, %s148
      %s165 = sphi 0, %s149
      %s173 = sphi 0, %s175
      %s176 = sphi 0, %s173
      %s177 = sphi 0, %s176
      %s193 = sphi 0, %s177
      %s201 = sphi 0, %s203
      %s204 = sphi 0, %s201
      %s205 = sphi 0, %s204
      %s221 = sphi 0, %s205
    $region4: #{tpu_custom_call.1} parent=1 // loop_header_branch
      %22 = sbr.rel (%p20) target = $region8
    $region5: #{tpu_custom_call.1} parent=1 // loop_body
      %s24 = ssub.s32 %s19, 1
      %s25 = ssub.s32 %s19, 2
      %s32 = sadd.s32 1, %s27
      %p33 = scmp.ge.s32.totalorder %s32, 1
      %s34 = scalar_select %p33, 0, %s32
      %s35 = sadd.s32 1, %s26
      %s36 = scalar_select %p33, %s35, %s26
      %p37 = scmp.ge.s32.totalorder %s36, 2
      %s38 = scalar_select %p37, 0, %s36
      %s39 = ssub.s32 %s26, %s38
      %p40 = scmp.eq.s32.totalorder %s39, 0
      %s42 = sadd.s32 %s41, 1
      %s43 = scalar_select %p40, %s41, %s42
      %p46 = pneg %p40
      %p47 = scmp.eq.s32.totalorder %s19, 1
      %p48 = por %p46, %p47
      %p49 = scmp.ne.s32.totalorder %s41, %s44
      %p50 = scmp.eq.s32.totalorder %s19, 0
      %p51 = por %p49, %p50
      %p52 = scmp.ne.s32.totalorder %s41, %s44
      %p53 = scmp.eq.s32.totalorder %s24, 1
      %p54 = por %p52, %p53
      %p55 = scmp.ne.s32.totalorder %s44, %s45
      %p56 = scmp.eq.s32.totalorder %s24, 0
      %p57 = por %p55, %p56
      %p58 = scmp.ne.s32.totalorder %s44, %s45
      %p59 = scmp.eq.s32.totalorder %s25, 1
      %p60 = por %p58, %p59
      %p62 = scmp.ne.s32.totalorder %s45, %s61
      %p63 = scmp.eq.s32.totalorder %s25, 0
      %p64 = por %p62, %p63
      %s65 = ssub.s32 %s27, %s34
      %p66 = scmp.eq.s32.totalorder %s65, 0
      %s68 = sadd.s32 %s67, 1
      %s69 = scalar_select %p66, %s67, %s68
      %p72 = pneg %p66
      %p73 = scmp.eq.s32.totalorder %s19, 1
      %p74 = por %p72, %p73
      %p75 = scmp.ne.s32.totalorder %s67, %s70
      %p76 = scmp.eq.s32.totalorder %s19, 0
      %p77 = por %p75, %p76
      %p78 = scmp.ne.s32.totalorder %s67, %s70
      %p79 = scmp.eq.s32.totalorder %s24, 1
      %p80 = por %p78, %p79
      %p81 = scmp.ne.s32.totalorder %s70, %s71
      %p82 = scmp.eq.s32.totalorder %s24, 0
      %p83 = por %p81, %p82
      %p84 = scmp.ne.s32.totalorder %s70, %s71
      %p85 = scmp.eq.s32.totalorder %s25, 1
      %p86 = por %p84, %p85
      %p88 = scmp.ne.s32.totalorder %s71, %s87
      %p89 = scmp.eq.s32.totalorder %s25, 0
      %p90 = por %p88, %p89
      %s91 = ssub.s32 %s27, %s34
      %p92 = scmp.eq.s32.totalorder %s91, 0
      %s94 = sadd.s32 %s93, 1
      %s95 = scalar_select %p92, %s93, %s94
      %p98 = pneg %p92
      %p99 = scmp.eq.s32.totalorder %s19, 1
      %p100 = por %p98, %p99
      %p101 = scmp.ne.s32.totalorder %s93, %s96
      %p102 = scmp.eq.s32.totalorder %s19, 0
      %p103 = por %p101, %p102
      %p104 = scmp.ne.s32.totalorder %s93, %s96
      %p105 = scmp.eq.s32.totalorder %s24, 1
      %p106 = por %p104, %p105
      %p107 = scmp.ne.s32.totalorder %s96, %s97
      %p108 = scmp.eq.s32.totalorder %s24, 0
      %p109 = por %p107, %p108
      %p110 = scmp.ne.s32.totalorder %s96, %s97
      %p111 = scmp.eq.s32.totalorder %s25, 1
      %p112 = por %p110, %p111
      %p114 = scmp.ne.s32.totalorder %s97, %s113
      %p115 = scmp.eq.s32.totalorder %s25, 0
      %p116 = por %p114, %p115
      %s117 = ssub.s32 %s27, %s34
      %p118 = scmp.eq.s32.totalorder %s117, 0
      %s120 = sadd.s32 %s119, 1
      %s121 = scalar_select %p118, %s119, %s120
      %p124 = pneg %p118
      %p125 = scmp.eq.s32.totalorder %s19, 1
      %p126 = por %p124, %p125
      %p127 = scmp.ne.s32.totalorder %s119, %s122
      %p128 = scmp.eq.s32.totalorder %s19, 0
      %p129 = por %p127, %p128
      %p130 = scmp.ne.s32.totalorder %s119, %s122
      %p131 = scmp.eq.s32.totalorder %s24, 1
      %p132 = por %p130, %p131
      %p133 = scmp.ne.s32.totalorder %s122, %s123
      %p134 = scmp.eq.s32.totalorder %s24, 0
      %p135 = por %p133, %p134
      %p136 = scmp.ne.s32.totalorder %s122, %s123
      %p137 = scmp.eq.s32.totalorder %s25, 1
      %p138 = por %p136, %p137
      %p140 = scmp.ne.s32.totalorder %s123, %s139
      %p141 = scmp.eq.s32.totalorder %s25, 0
      %p142 = por %p140, %p141
      %s143 = ssub.s32 %s27, %s34
      %p144 = scmp.eq.s32.totalorder %s143, 0
      %s146 = sadd.s32 %s145, 1
      %s147 = scalar_select %p144, %s145, %s146
      %p150 = pneg %p144
      %p151 = scmp.eq.s32.totalorder %s19, 1
      %p152 = por %p150, %p151
      %p153 = scmp.ne.s32.totalorder %s145, %s148
      %p154 = scmp.eq.s32.totalorder %s19, 0
      %p155 = por %p153, %p154
      %p156 = scmp.ne.s32.totalorder %s145, %s148
      %p157 = scmp.eq.s32.totalorder %s24, 1
      %p158 = por %p156, %p157
      %p159 = scmp.ne.s32.totalorder %s148, %s149
      %p160 = scmp.eq.s32.totalorder %s24, 0
      %p161 = por %p159, %p160
      %p162 = scmp.ne.s32.totalorder %s148, %s149
      %p163 = scmp.eq.s32.totalorder %s25, 1
      %p164 = por %p162, %p163
      %p166 = scmp.ne.s32.totalorder %s149, %s165
      %p167 = scmp.eq.s32.totalorder %s25, 0
      %p168 = por %p166, %p167
      %s169 = ssub.s32 %s26, %s38
      %s170 = ssub.s32 %s27, %s34
      %s171 = sor.u32 %s169, %s170
      %p172 = scmp.eq.s32.totalorder %s171, 0
      %s174 = sadd.s32 %s173, 1
      %s175 = scalar_select %p172, %s173, %s174
      %p178 = pneg %p172
      %p179 = scmp.eq.s32.totalorder %s19, 1
      %p180 = por %p178, %p179
      %p181 = scmp.ne.s32.totalorder %s173, %s176
      %p182 = scmp.eq.s32.totalorder %s19, 0
      %p183 = por %p181, %p182
      %p184 = scmp.ne.s32.totalorder %s173, %s176
      %p185 = scmp.eq.s32.totalorder %s24, 1
      %p186 = por %p184, %p185
      %p187 = scmp.ne.s32.totalorder %s176, %s177
      %p188 = scmp.eq.s32.totalorder %s24, 0
      %p189 = por %p187, %p188
      %p190 = scmp.ne.s32.totalorder %s176, %s177
      %p191 = scmp.eq.s32.totalorder %s25, 1
      %p192 = por %p190, %p191
      %p194 = scmp.ne.s32.totalorder %s177, %s193
      %p195 = scmp.eq.s32.totalorder %s25, 0
      %p196 = por %p194, %p195
      %s197 = ssub.s32 %s26, %s38
      %s198 = ssub.s32 %s27, %s34
      %s199 = sor.u32 %s197, %s198
      %p200 = scmp.eq.s32.totalorder %s199, 0
      %s202 = sadd.s32 %s201, 1
      %s203 = scalar_select %p200, %s201, %s202
      %p206 = pneg %p200
      %p207 = scmp.eq.s32.totalorder %s19, 1
      %p208 = por %p206, %p207
      %p209 = scmp.ne.s32.totalorder %s201, %s204
      %p210 = scmp.eq.s32.totalorder %s19, 0
      %p211 = por %p209, %p210
      %p212 = scmp.ne.s32.totalorder %s201, %s204
      %p213 = scmp.eq.s32.totalorder %s24, 1
      %p214 = por %p212, %p213
      %p215 = scmp.ne.s32.totalorder %s204, %s205
      %p216 = scmp.eq.s32.totalorder %s24, 0
      %p217 = por %p215, %p216
      %p218 = scmp.ne.s32.totalorder %s204, %s205
      %p219 = scmp.eq.s32.totalorder %s25, 1
      %p220 = por %p218, %p219
      %p222 = scmp.ne.s32.totalorder %s205, %s221
      %p223 = scmp.eq.s32.totalorder %s25, 0
      %p224 = por %p222, %p223
      %p225 = scmp.le.s32.totalorder 1, %s19
      %p226 = scmp.lt.s32.totalorder %s19, 3
      %p227 = pnand %p225, %p226
      %p228 = pneg %p227
      // Predicated region
      $region9: #{tpu_custom_call.1} parent=5 // pred_check
        _
      $region10: #{tpu_custom_call.1} parent=5 // pred_check_branch
        %230 = sbr.rel (%p227) target = $region12
      $region11: #{tpu_custom_call.1} parent=5 // pred_region
        %s231 = ssub.s32 %s19, 1
        // Predicated region
        $region13: #{tpu_custom_call.1} parent=11 // pred_check
          %p232 = pneg %p83
        $region14: #{tpu_custom_call.1} parent=11 // pred_check_branch
          %234 = sbr.rel (%p232) target = $region16
        $region15: #{tpu_custom_call.1} parent=11 // pred_region
          %s235 = smul.u32 4, %s29
          %p236 = scmp.lt.s32.totalorder %s235, 3
          %s237 = scalar_select %p236, %s235, 3
          %s238 = smul.addr %s237, 8
          %s239 = scalar_lea.vmem %s1, %s238
          %s240 = smul.u32 4, %s29
        $region16: #{tpu_custom_call.1} parent=11 // pred_fallthru
          _
        // Predicated region
        $region17: #{tpu_custom_call.1} parent=11 // pred_check
          %p241 = pneg %p109
        $region18: #{tpu_custom_call.1} parent=11 // pred_check_branch
          %243 = sbr.rel (%p241) target = $region20
        $region19: #{tpu_custom_call.1} parent=11 // pred_region
          %s244 = smul.u32 4, %s29
          %p245 = scmp.lt.s32.totalorder %s244, 3
          %s246 = scalar_select %p245, %s244, 3
          %s247 = smul.addr %s246, 8
          %s248 = scalar_lea.vmem %s2, %s247
          %s249 = smul.u32 4, %s29
        $region20: #{tpu_custom_call.1} parent=11 // pred_fallthru
          _
        // Predicated region
        $region21: #{tpu_custom_call.1} parent=11 // pred_check
          %p250 = pneg %p135
        $region22: #{tpu_custom_call.1} parent=11 // pred_check_branch
          %252 = sbr.rel (%p250) target = $region24
        $region23: #{tpu_custom_call.1} parent=11 // pred_region
          %s253 = smul.u32 4, %s29
          %p254 = scmp.lt.s32.totalorder %s253, 3
          %s255 = scalar_select %p254, %s253, 3
          %s256 = smul.addr %s255, 8
          %s257 = scalar_lea.vmem %s3, %s256
          %s258 = smul.u32 4, %s29
        $region24: #{tpu_custom_call.1} parent=11 // pred_fallthru
          _
        // Predicated region
        $region25: #{tpu_custom_call.1} parent=11 // pred_check
          %p259 = pneg %p161
        $region26: #{tpu_custom_call.1} parent=11 // pred_check_branch
          %261 = sbr.rel (%p259) target = $region28
        $region27: #{tpu_custom_call.1} parent=11 // pred_region
          %s262 = smul.u32 4, %s29
          %p263 = scmp.lt.s32.totalorder %s262, 3
          %s264 = scalar_select %p263, %s262, 3
          %s265 = smul.addr %s264, 8
          %s266 = scalar_lea.vmem %s4, %s265
          %s267 = smul.u32 4, %s29
        $region28: #{tpu_custom_call.1} parent=11 // pred_fallthru
          _
      $region12: #{tpu_custom_call.1} parent=5 // pred_fallthru
        _
      %p268 = scmp.lt.s32.totalorder %s19, 2
      // Predicated region
      $region29: #{tpu_custom_call.1} parent=5 // pred_check
        %p269 = pneg %p268
      $region30: #{tpu_custom_call.1} parent=5 // pred_check_branch
        %271 = sbr.rel (%p269) target = $region32
      $region31: #{tpu_custom_call.1} parent=5 // pred_region
        // Predicated region
        $region33: #{tpu_custom_call.1} parent=31 // pred_check
          %p272 = pneg %p51
        $region34: #{tpu_custom_call.1} parent=31 // pred_check_branch
          %274 = sbr.rel (%p272) target = $region36
        $region35: #{tpu_custom_call.1} parent=31 // pred_region
          %p275 = scmp.lt.s32.totalorder %s26, 1
          %s276 = scalar_select %p275, %s26, 1
          %s277 = smul.addr %s276, 2
          %s278 = smul.addr %s277, 4
          %s279 = scalar_lea.vmem %s0, %s278
        $region36: #{tpu_custom_call.1} parent=31 // pred_fallthru
          _
      $region32: #{tpu_custom_call.1} parent=5 // pred_fallthru
        _
      %p280 = scmp.le.s32.totalorder 1, %s19
      %p281 = scmp.lt.s32.totalorder %s19, 3
      %p282 = pnand %p280, %p281
      %p283 = pneg %p282
      // Predicated region
      $region37: #{tpu_custom_call.1} parent=5 // pred_check
        _
      $region38: #{tpu_custom_call.1} parent=5 // pred_check_branch
        %285 = sbr.rel (%p282) target = $region40
      $region39: #{tpu_custom_call.1} parent=5 // pred_region
        %s286 = ssub.s32 %s19, 1
        %p287 = scmp.lt.s32.totalorder %s28, 1
        %s288 = scalar_select %p287, %s28, 1
        %s289 = smul.addr %s288, 2
        %s290 = smul.addr %s289, 4
        %s291 = scalar_lea.vmem %s0, %s290
        %p292 = pneg %p57
        %p293 = pneg %p54
        %s294 = smul.u32 4, %s29
        %p295 = scmp.lt.s32.totalorder %s294, 3
        %s296 = scalar_select %p295, %s294, 3
        %s297 = smul.addr %s296, 8
        %s298 = scalar_lea.vmem %s1, %s297
        %p299 = pneg %p83
        %p300 = pneg %p80
        %s301 = smul.u32 4, %s29
        %p302 = scmp.lt.s32.totalorder %s301, 3
        %s303 = scalar_select %p302, %s301, 3
        %s304 = smul.addr %s303, 8
        %s305 = scalar_lea.vmem %s2, %s304
        %p306 = pneg %p109
        %p307 = pneg %p106
        %s308 = smul.u32 4, %s29
        %p309 = scmp.lt.s32.totalorder %s308, 3
        %s310 = scalar_select %p309, %s308, 3
        %s311 = smul.addr %s310, 8
        %s312 = scalar_lea.vmem %s3, %s311
        %p313 = pneg %p135
        %p314 = pneg %p132
        %s315 = smul.u32 4, %s29
        %p316 = scmp.lt.s32.totalorder %s315, 3
        %s317 = scalar_select %p316, %s315, 3
        %s318 = smul.addr %s317, 8
        %s319 = scalar_lea.vmem %s4, %s318
        %p320 = pneg %p161
        %p321 = pneg %p158
        %p322 = pneg %p189
        %p323 = pneg %p186
        %s324 = sand.u32 %s176, 1
        %s325 = scalar_lea.sflag [#allocation5], %s324
        %s326 = sand.u32 %s176, 1
        %s327 = smul.addr %s326, 64
        %s328 = scalar_lea.vmem [#allocation4], %s327
        %p329 = pneg %p217
        %p330 = pneg %p214
        %s331 = sand.u32 %s204, 1
        %s332 = scalar_lea.sflag [#allocation7], %s331
        %s333 = sand.u32 %s204, 1
        %s334 = smul.addr %s333, 64
        %s335 = scalar_lea.vmem [#allocation6], %s334
        %p336 = scmp.lt.s32.totalorder %s28, 1
        %s337 = scalar_select %p336, %s28, 1
        %s338 = smul.addr %s337, 2
        %s339 = smul.addr %s338, 4
        %s340 = scalar_lea.vmem %s0, %s339
        %s341 = smul.u32 4, %s29
        %p342 = scmp.lt.s32.totalorder %s341, 3
        %s343 = scalar_select %p342, %s341, 3
        %s344 = smul.addr %s343, 8
        %s345 = scalar_lea.vmem %s1, %s344
        %s346 = smul.u32 4, %s29
        %s347 = smul.u32 4, %s29
        %p348 = scmp.lt.s32.totalorder %s347, 3
        %s349 = scalar_select %p348, %s347, 3
        %s350 = smul.addr %s349, 8
        %s351 = scalar_lea.vmem %s2, %s350
        %s352 = smul.u32 4, %s29
        %s353 = smul.u32 4, %s29
        %p354 = scmp.lt.s32.totalorder %s353, 3
        %s355 = scalar_select %p354, %s353, 3
        %s356 = smul.addr %s355, 8
        %s357 = scalar_lea.vmem %s3, %s356
        %s358 = smul.u32 4, %s29
        %s359 = smul.u32 4, %s29
        %p360 = scmp.lt.s32.totalorder %s359, 3
        %s361 = scalar_select %p360, %s359, 3
        %s362 = smul.addr %s361, 8
        %s363 = scalar_lea.vmem %s4, %s362
        %s364 = smul.u32 4, %s29
        %s365 = smul.u32 4, %s29
        %s366 = smul.u32 4, %s29
        %v367 = vld [vmem:[%s340] sm:$0xff]
        %v368 = vld [vmem:[%s345] sm:$0xff]
        %v369 = vld [vmem:[%s345 + $0x8] sm:$0xff]
        %v370 = vld [vmem:[%s345 + $0x10] sm:$0xff]
        %v371 = vld [vmem:[%s345 + $0x18] sm:$0xff]
        %v372 = vld [vmem:[%s357] sm:$0xff]
        %v373 = vld [vmem:[%s357 + $0x8] sm:$0xff]
        %v374 = vld [vmem:[%s357 + $0x10] sm:$0xff]
        %v375 = vld [vmem:[%s357 + $0x18] sm:$0xff]
        %377 = vset.pattern.permute.xlu0 0
        %378 = vperm.xlu0 %377, %v372
        %v379 = vpop.permute.xlu0 %378
        %382 = vset.pattern.permute.xlu0 0
        %383 = vperm.xlu0 %382, %v373
        %v384 = vpop.permute.xlu0 %383
        %387 = vset.pattern.permute.xlu0 0
        %388 = vperm.xlu0 %387, %v374
        %v389 = vpop.permute.xlu0 %388
        %392 = vset.pattern.permute.xlu0 0
        %393 = vperm.xlu0 %392, %v375
        %v394 = vpop.permute.xlu0 %393
        %397 = vst [vmem:[#allocation1] ss:$2 sm:$0xff] %v367
        %v398 = vld.sshfl [vmem:[#allocation1] sm:$0xff pattern:$0x75316420]
        %v399 = vld.sshfl [vmem:[#allocation1 + $0x8] sm:$0xff pattern:$0x75316420]
        %vm400 = vcmask 31744
        %v402 = vsel %vm400, %v368, 0
        %v405 = vsel %vm400, %v369, 0
        %v408 = vsel %vm400, %v370, 0
        %v411 = vsel %vm400, %v371, 0
        %vm413 = vcmask 1043456
        %v414 = vsel %vm413, %v398, 0
        %v416 = vsel %vm413, %v399, 0
        %418 = vmatpush.msra.mxu0 0.0
        %419 = vmatpush.msra.mxu0 0.0
        %420 = vmatpush.msra.mxu0 0.0
        %421 = vmatpush.msra.mxu0 0.0
        %422 = vmatpush.msra.mxu0 0.0
        %423 = vmatpush.msra.mxu0 0.0
        %424 = vmatpush.msra.mxu0 0.0
        %425 = vmatpush.msra.mxu0 0.0
        %426 = vmatpush.msra.mxu0 0.0
        %427 = vmatpush.msra.mxu0 0.0
        %428 = vmatpush.msra.mxu0 0.0
        %429 = vmatpush.msra.mxu0 0.0
        %430 = vmatpush.msra.mxu0 0.0
        %431 = vmatpush.msra.mxu0 0.0
        %432 = vmatpush.msra.mxu0 0.0
        %433 = vmatpush.msra.mxu0 %v414
        %434 = vmatmul.f32.gmra.mxu0 %v402
        %v435 = vpop.f32.mrf.mxu0
        %v436 = vadd.f32 %v379, %v435
        %437 = vmatmul.f32.gmra.mxu0 %v405
        %v438 = vpop.f32.mrf.mxu0
        %v439 = vadd.f32 %v384, %v438
        %440 = vmatmul.f32.gmra.mxu0 %v408
        %v441 = vpop.f32.mrf.mxu0
        %v442 = vadd.f32 %v389, %v441
        %443 = vmatmul.f32.gmra.mxu0 %v411
        %v444 = vpop.f32.mrf.mxu0
        %v445 = vadd.f32 %v394, %v444
        %446 = vdwg.mxu0
        %447 = vmatpush.msra.mxu0 0.0
        %448 = vmatpush.msra.mxu0 0.0
        %449 = vmatpush.msra.mxu0 0.0
        %450 = vmatpush.msra.mxu0 0.0
        %451 = vmatpush.msra.mxu0 0.0
        %452 = vmatpush.msra.mxu0 0.0
        %453 = vmatpush.msra.mxu0 0.0
        %454 = vmatpush.msra.mxu0 0.0
        %455 = vmatpush.msra.mxu0 0.0
        %456 = vmatpush.msra.mxu0 0.0
        %457 = vmatpush.msra.mxu0 0.0
        %458 = vmatpush.msra.mxu0 0.0
        %459 = vmatpush.msra.mxu0 0.0
        %460 = vmatpush.msra.mxu0 0.0
        %461 = vmatpush.msra.mxu0 0.0
        %462 = vmatpush.msra.mxu0 %v416
        %463 = vmatmul.f32.gmra.mxu0 %v402
        %v464 = vpop.f32.mrf.mxu0
        %v465 = vadd.f32 %v379, %v464
        %466 = vmatmul.f32.gmra.mxu0 %v405
        %v467 = vpop.f32.mrf.mxu0
        %v468 = vadd.f32 %v384, %v467
        %469 = vmatmul.f32.gmra.mxu0 %v408
        %v470 = vpop.f32.mrf.mxu0
        %v471 = vadd.f32 %v389, %v470
        %472 = vmatmul.f32.gmra.mxu0 %v411
        %v473 = vpop.f32.mrf.mxu0
        %v474 = vadd.f32 %v394, %v473
        %475 = vdwg.mxu0
        %v476 = vld [vmem:[%s351] sm:$0xff]
        %v477 = vld [vmem:[%s351 + $0x8] sm:$0xff]
        %v478 = vld [vmem:[%s351 + $0x10] sm:$0xff]
        %v479 = vld [vmem:[%s351 + $0x18] sm:$0xff]
        %v480 = vld [vmem:[%s363] sm:$0xff]
        %v481 = vld [vmem:[%s363 + $0x8] sm:$0xff]
        %v482 = vld [vmem:[%s363 + $0x10] sm:$0xff]
        %v483 = vld [vmem:[%s363 + $0x18] sm:$0xff]
        %485 = vset.pattern.permute.xlu0 0
        %486 = vperm.xlu0 %485, %v480
        %v487 = vpop.permute.xlu0 %486
        %490 = vset.pattern.permute.xlu0 0
        %491 = vperm.xlu0 %490, %v481
        %v492 = vpop.permute.xlu0 %491
        %495 = vset.pattern.permute.xlu0 0
        %496 = vperm.xlu0 %495, %v482
        %v497 = vpop.permute.xlu0 %496
        %500 = vset.pattern.permute.xlu0 0
        %501 = vperm.xlu0 %500, %v483
        %v502 = vpop.permute.xlu0 %501
        %504 = vst [vmem:[#allocation1] ss:$2 sm:$0xff] %v367
        %v505 = vld.sshfl [vmem:[#allocation1] sm:$0xff pattern:$0x75316420]
        %v506 = vld.sshfl [vmem:[#allocation1 + $0x8] sm:$0xff pattern:$0x75316420]
        %v508 = vsel %vm400, %v476, 0
        %v511 = vsel %vm400, %v477, 0
        %v514 = vsel %vm400, %v478, 0
        %v517 = vsel %vm400, %v479, 0
        %v519 = vsel %vm413, %v505, 0
        %v521 = vsel %vm413, %v506, 0
        %523 = vmatpush.msra.mxu0 0.0
        %524 = vmatpush.msra.mxu0 0.0
        %525 = vmatpush.msra.mxu0 0.0
        %526 = vmatpush.msra.mxu0 0.0
        %527 = vmatpush.msra.mxu0 0.0
        %528 = vmatpush.msra.mxu0 0.0
        %529 = vmatpush.msra.mxu0 0.0
        %530 = vmatpush.msra.mxu0 0.0
        %531 = vmatpush.msra.mxu0 0.0
        %532 = vmatpush.msra.mxu0 0.0
        %533 = vmatpush.msra.mxu0 0.0
        %534 = vmatpush.msra.mxu0 0.0
        %535 = vmatpush.msra.mxu0 0.0
        %536 = vmatpush.msra.mxu0 0.0
        %537 = vmatpush.msra.mxu0 0.0
        %538 = vmatpush.msra.mxu0 %v519
        %539 = vmatmul.f32.gmra.mxu0 %v508
        %v540 = vpop.f32.mrf.mxu0
        %v541 = vadd.f32 %v487, %v540
        %542 = vmatmul.f32.gmra.mxu0 %v511
        %v543 = vpop.f32.mrf.mxu0
        %v544 = vadd.f32 %v492, %v543
        %545 = vmatmul.f32.gmra.mxu0 %v514
        %v546 = vpop.f32.mrf.mxu0
        %v547 = vadd.f32 %v497, %v546
        %548 = vmatmul.f32.gmra.mxu0 %v517
        %v549 = vpop.f32.mrf.mxu0
        %v550 = vadd.f32 %v502, %v549
        %551 = vdwg.mxu0
        %552 = vmatpush.msra.mxu0 0.0
        %553 = vmatpush.msra.mxu0 0.0
        %554 = vmatpush.msra.mxu0 0.0
        %555 = vmatpush.msra.mxu0 0.0
        %556 = vmatpush.msra.mxu0 0.0
        %557 = vmatpush.msra.mxu0 0.0
        %558 = vmatpush.msra.mxu0 0.0
        %559 = vmatpush.msra.mxu0 0.0
        %560 = vmatpush.msra.mxu0 0.0
        %561 = vmatpush.msra.mxu0 0.0
        %562 = vmatpush.msra.mxu0 0.0
        %563 = vmatpush.msra.mxu0 0.0
        %564 = vmatpush.msra.mxu0 0.0
        %565 = vmatpush.msra.mxu0 0.0
        %566 = vmatpush.msra.mxu0 0.0
        %567 = vmatpush.msra.mxu0 %v521
        %568 = vmatmul.f32.gmra.mxu0 %v508
        %v569 = vpop.f32.mrf.mxu0
        %v570 = vadd.f32 %v487, %v569
        %571 = vmatmul.f32.gmra.mxu0 %v511
        %v572 = vpop.f32.mrf.mxu0
        %v573 = vadd.f32 %v492, %v572
        %574 = vmatmul.f32.gmra.mxu0 %v514
        %v575 = vpop.f32.mrf.mxu0
        %v576 = vadd.f32 %v497, %v575
        %577 = vmatmul.f32.gmra.mxu0 %v517
        %v578 = vpop.f32.mrf.mxu0
        %v579 = vadd.f32 %v502, %v578
        %580 = vdwg.mxu0
        %v581 = vtanh.pop %v436
        %v582 = vtanh.pop %v465
        %v583 = vtanh.pop %v439
        %v584 = vtanh.pop %v468
        %v585 = vtanh.pop %v442
        %v586 = vtanh.pop %v471
        %v587 = vtanh.pop %v445
        %v588 = vtanh.pop %v474
        %v589 = vxor.u32 %v541, 2147483648
        %v590 = vxor.u32 %v570, 2147483648
        %v591 = vxor.u32 %v544, 2147483648
        %v592 = vxor.u32 %v573, 2147483648
        %v593 = vxor.u32 %v547, 2147483648
        %v594 = vxor.u32 %v576, 2147483648
        %v595 = vxor.u32 %v550, 2147483648
        %v596 = vxor.u32 %v579, 2147483648
        %v597 = vmul.f32 %v589, 1.442695
        %v598 = vpow.pop %v597
        %v599 = vmul.f32 %v590, 1.442695
        %v600 = vpow.pop %v599
        %v601 = vmul.f32 %v591, 1.442695
        %v602 = vpow.pop %v601
        %v603 = vmul.f32 %v592, 1.442695
        %v604 = vpow.pop %v603
        %v605 = vmul.f32 %v593, 1.442695
        %v606 = vpow.pop %v605
        %v607 = vmul.f32 %v594, 1.442695
        %v608 = vpow.pop %v607
        %v609 = vmul.f32 %v595, 1.442695
        %v610 = vpow.pop %v609
        %v611 = vmul.f32 %v596, 1.442695
        %v612 = vpow.pop %v611
        %v613 = vadd.f32 %v598, 1.0
        %v614 = vadd.f32 %v600, 1.0
        %v615 = vadd.f32 %v602, 1.0
        %v616 = vadd.f32 %v604, 1.0
        %v617 = vadd.f32 %v606, 1.0
        %v618 = vadd.f32 %v608, 1.0
        %v619 = vadd.f32 %v610, 1.0
        %v620 = vadd.f32 %v612, 1.0
        %v621 = vrcp.pop %v613
        %v622 = vmul.f32 %v613, %v621
        %v623 = vsub.f32 1.0, %v622
        %v624 = vmul.f32 %v621, %v623
        %v625 = vadd.f32 %v621, %v624
        %vm626 = vweird.f32 %v613
        %vm627 = vweird.f32 %v621
        %vm628 = vmor %vm626, %vm627
        %v629 = vsel %vm628, %v621, %v625
        %v630 = vand.u32 2147483647, %v613
        %vm631 = vcmp.eq.f32.partialorder %v630, 8.507059e+37
        %v632 = vand.u32 %v613, 2147483648
        %v633 = vor.u32 1.1754944e-38, %v632
        %v634 = vsel %vm631, %v633, %v629
        %v635 = vmul.f32 1.0, %v634
        %v636 = vrcp.pop %v614
        %v637 = vmul.f32 %v614, %v636
        %v638 = vsub.f32 1.0, %v637
        %v639 = vmul.f32 %v636, %v638
        %v640 = vadd.f32 %v636, %v639
        %vm641 = vweird.f32 %v614
        %vm642 = vweird.f32 %v636
        %vm643 = vmor %vm641, %vm642
        %v644 = vsel %vm643, %v636, %v640
        %v645 = vand.u32 2147483647, %v614
        %vm646 = vcmp.eq.f32.partialorder %v645, 8.507059e+37
        %v647 = vand.u32 %v614, 2147483648
        %v648 = vor.u32 1.1754944e-38, %v647
        %v649 = vsel %vm646, %v648, %v644
        %v650 = vmul.f32 1.0, %v649
        %v651 = vrcp.pop %v615
        %v652 = vmul.f32 %v615, %v651
        %v653 = vsub.f32 1.0, %v652
        %v654 = vmul.f32 %v651, %v653
        %v655 = vadd.f32 %v651, %v654
        %vm656 = vweird.f32 %v615
        %vm657 = vweird.f32 %v651
        %vm658 = vmor %vm656, %vm657
        %v659 = vsel %vm658, %v651, %v655
        %v660 = vand.u32 2147483647, %v615
        %vm661 = vcmp.eq.f32.partialorder %v660, 8.507059e+37
        %v662 = vand.u32 %v615, 2147483648
        %v663 = vor.u32 1.1754944e-38, %v662
        %v664 = vsel %vm661, %v663, %v659
        %v665 = vmul.f32 1.0, %v664
        %v666 = vrcp.pop %v616
        %v667 = vmul.f32 %v616, %v666
        %v668 = vsub.f32 1.0, %v667
        %v669 = vmul.f32 %v666, %v668
        %v670 = vadd.f32 %v666, %v669
        %vm671 = vweird.f32 %v616
        %vm672 = vweird.f32 %v666
        %vm673 = vmor %vm671, %vm672
        %v674 = vsel %vm673, %v666, %v670
        %v675 = vand.u32 2147483647, %v616
        %vm676 = vcmp.eq.f32.partialorder %v675, 8.507059e+37
        %v677 = vand.u32 %v616, 2147483648
        %v678 = vor.u32 1.1754944e-38, %v677
        %v679 = vsel %vm676, %v678, %v674
        %v680 = vmul.f32 1.0, %v679
        %v681 = vrcp.pop %v617
        %v682 = vmul.f32 %v617, %v681
        %v683 = vsub.f32 1.0, %v682
        %v684 = vmul.f32 %v681, %v683
        %v685 = vadd.f32 %v681, %v684
        %vm686 = vweird.f32 %v617
        %vm687 = vweird.f32 %v681
        %vm688 = vmor %vm686, %vm687
        %v689 = vsel %vm688, %v681, %v685
        %v690 = vand.u32 2147483647, %v617
        %vm691 = vcmp.eq.f32.partialorder %v690, 8.507059e+37
        %v692 = vand.u32 %v617, 2147483648
        %v693 = vor.u32 1.1754944e-38, %v692
        %v694 = vsel %vm691, %v693, %v689
        %v695 = vmul.f32 1.0, %v694
        %v696 = vrcp.pop %v618
        %v697 = vmul.f32 %v618, %v696
        %v698 = vsub.f32 1.0, %v697
        %v699 = vmul.f32 %v696, %v698
        %v700 = vadd.f32 %v696, %v699
        %vm701 = vweird.f32 %v618
        %vm702 = vweird.f32 %v696
        %vm703 = vmor %vm701, %vm702
        %v704 = vsel %vm703, %v696, %v700
        %v705 = vand.u32 2147483647, %v618
        %vm706 = vcmp.eq.f32.partialorder %v705, 8.507059e+37
        %v707 = vand.u32 %v618, 2147483648
        %v708 = vor.u32 1.1754944e-38, %v707
        %v709 = vsel %vm706, %v708, %v704
        %v710 = vmul.f32 1.0, %v709
        %v711 = vrcp.pop %v619
        %v712 = vmul.f32 %v619, %v711
        %v713 = vsub.f32 1.0, %v712
        %v714 = vmul.f32 %v711, %v713
        %v715 = vadd.f32 %v711, %v714
        %vm716 = vweird.f32 %v619
        %vm717 = vweird.f32 %v711
        %vm718 = vmor %vm716, %vm717
        %v719 = vsel %vm718, %v711, %v715
        %v720 = vand.u32 2147483647, %v619
        %vm721 = vcmp.eq.f32.partialorder %v720, 8.507059e+37
        %v722 = vand.u32 %v619, 2147483648
        %v723 = vor.u32 1.1754944e-38, %v722
        %v724 = vsel %vm721, %v723, %v719
        %v725 = vmul.f32 1.0, %v724
        %v726 = vrcp.pop %v620
        %v727 = vmul.f32 %v620, %v726
        %v728 = vsub.f32 1.0, %v727
        %v729 = vmul.f32 %v726, %v728
        %v730 = vadd.f32 %v726, %v729
        %vm731 = vweird.f32 %v620
        %vm732 = vweird.f32 %v726
        %vm733 = vmor %vm731, %vm732
        %v734 = vsel %vm733, %v726, %v730
        %v735 = vand.u32 2147483647, %v620
        %vm736 = vcmp.eq.f32.partialorder %v735, 8.507059e+37
        %v737 = vand.u32 %v620, 2147483648
        %v738 = vor.u32 1.1754944e-38, %v737
        %v739 = vsel %vm736, %v738, %v734
        %v740 = vmul.f32 1.0, %v739
        %741 = vst [vmem:[#allocation2] sm:$0xff] %v635
        %742 = vst [vmem:[#allocation2 + $0x8] sm:$0xff] %v650
        %743 = vst [vmem:[#allocation2 + $0x10] sm:$0xff] %v665
        %744 = vst [vmem:[#allocation2 + $0x18] sm:$0xff] %v680
        %745 = vst [vmem:[#allocation2 + $0x20] sm:$0xff] %v695
        %746 = vst [vmem:[#allocation2 + $0x28] sm:$0xff] %v710
        %747 = vst [vmem:[#allocation2 + $0x30] sm:$0xff] %v725
        %748 = vst [vmem:[#allocation2 + $0x38] sm:$0xff] %v740
        %v749 = vsub.f32 1.0, %v635
        %v750 = vsub.f32 1.0, %v650
        %v751 = vsub.f32 1.0, %v665
        %v752 = vsub.f32 1.0, %v680
        %v753 = vsub.f32 1.0, %v695
        %v754 = vsub.f32 1.0, %v710
        %v755 = vsub.f32 1.0, %v725
        %v756 = vsub.f32 1.0, %v740
        %v757 = vmul.f32 %v749, %v581
        %v758 = vmul.f32 %v750, %v582
        %v759 = vmul.f32 %v751, %v583
        %v760 = vmul.f32 %v752, %v584
        %v761 = vmul.f32 %v753, %v585
        %v762 = vmul.f32 %v754, %v586
        %v763 = vmul.f32 %v755, %v587
        %v764 = vmul.f32 %v756, %v588
        %765 = vst [vmem:[%s328] sm:$0xff] %v757
        %766 = vst [vmem:[%s328 + $0x8] sm:$0xff] %v758
        %767 = vst [vmem:[%s328 + $0x10] sm:$0xff] %v759
        %768 = vst [vmem:[%s328 + $0x18] sm:$0xff] %v760
        %769 = vst [vmem:[%s328 + $0x20] sm:$0xff] %v761
        %770 = vst [vmem:[%s328 + $0x28] sm:$0xff] %v762
        %771 = vst [vmem:[%s328 + $0x30] sm:$0xff] %v763
        %772 = vst [vmem:[%s328 + $0x38] sm:$0xff] %v764
        %v773 = vld [vmem:[#allocation2] sm:$0xff]
        %v774 = vld [vmem:[#allocation2 + $0x10] sm:$0xff]
        %v775 = vld [vmem:[#allocation2 + $0x20] sm:$0xff]
        %v776 = vld [vmem:[#allocation2 + $0x30] sm:$0xff]
        %v777 = vmul.f32 %v773, 0.0
        %v778 = vmul.f32 %v774, 0.0
        %v779 = vmul.f32 %v775, 0.0
        %v780 = vmul.f32 %v776, 0.0
        %v781 = vld [vmem:[%s328] sm:$0xff]
        %v782 = vld [vmem:[%s328 + $0x10] sm:$0xff]
        %v783 = vld [vmem:[%s328 + $0x20] sm:$0xff]
        %v784 = vld [vmem:[%s328 + $0x30] sm:$0xff]
        %v785 = vadd.f32 %v777, %v781
        %v786 = vadd.f32 %v778, %v782
        %v787 = vadd.f32 %v779, %v783
        %v788 = vadd.f32 %v780, %v784
        %vm789 = vcmask 130048
        %790 = vst.msk [vmem:[#allocation3] sm:$0xff] %vm789, %v785
        %791 = vst.msk [vmem:[#allocation3 + $0x10] sm:$0xff] %vm789, %v786
        %792 = vst.msk [vmem:[#allocation3 + $0x20] sm:$0xff] %vm789, %v787
        %793 = vst.msk [vmem:[#allocation3 + $0x30] sm:$0xff] %vm789, %v788
        %v794 = vld [vmem:[#allocation2] sm:$0xff]
        %v795 = vld [vmem:[#allocation2 + $0x10] sm:$0xff]
        %v796 = vld [vmem:[#allocation2 + $0x20] sm:$0xff]
        %v797 = vld [vmem:[#allocation2 + $0x30] sm:$0xff]
        %802 = vrot.lane.b32.xlu0 %v785, 16
        %v803 = vpop.permute.xlu0 %802
        %804 = vrot.lane.b32.xlu0 %v786, 16
        %v805 = vpop.permute.xlu0 %804
        %806 = vrot.lane.b32.xlu0 %v787, 16
        %v807 = vpop.permute.xlu0 %806
        %808 = vrot.lane.b32.xlu0 %v788, 16
        %v809 = vpop.permute.xlu0 %808
        %v814 = vmul.f32 %v794, %v803
        %v815 = vmul.f32 %v795, %v805
        %v816 = vmul.f32 %v796, %v807
        %v817 = vmul.f32 %v797, %v809
        %v818 = vld [vmem:[%s328] sm:$0xff]
        %v819 = vld [vmem:[%s328 + $0x10] sm:$0xff]
        %v820 = vld [vmem:[%s328 + $0x20] sm:$0xff]
        %v821 = vld [vmem:[%s328 + $0x30] sm:$0xff]
        %v822 = vadd.f32 %v814, %v818
        %v823 = vadd.f32 %v815, %v819
        %v824 = vadd.f32 %v816, %v820
        %v825 = vadd.f32 %v817, %v821
        %vm826 = vcmask 261248
        %827 = vst.msk [vmem:[#allocation3] sm:$0xff] %vm826, %v822
        %828 = vst.msk [vmem:[#allocation3 + $0x10] sm:$0xff] %vm826, %v823
        %829 = vst.msk [vmem:[#allocation3 + $0x20] sm:$0xff] %vm826, %v824
        %830 = vst.msk [vmem:[#allocation3 + $0x30] sm:$0xff] %vm826, %v825
        %v831 = vld [vmem:[#allocation2] sm:$0xff]
        %v832 = vld [vmem:[#allocation2 + $0x10] sm:$0xff]
        %v833 = vld [vmem:[#allocation2 + $0x20] sm:$0xff]
        %v834 = vld [vmem:[#allocation2 + $0x30] sm:$0xff]
        %839 = vrot.lane.b32.xlu0 %v822, 16
        %v840 = vpop.permute.xlu0 %839
        %841 = vrot.lane.b32.xlu0 %v823, 16
        %v842 = vpop.permute.xlu0 %841
        %843 = vrot.lane.b32.xlu0 %v824, 16
        %v844 = vpop.permute.xlu0 %843
        %845 = vrot.lane.b32.xlu0 %v825, 16
        %v846 = vpop.permute.xlu0 %845
        %v851 = vmul.f32 %v831, %v840
        %v852 = vmul.f32 %v832, %v842
        %v853 = vmul.f32 %v833, %v844
        %v854 = vmul.f32 %v834, %v846
        %v855 = vld [vmem:[%s328] sm:$0xff]
        %v856 = vld [vmem:[%s328 + $0x10] sm:$0xff]
        %v857 = vld [vmem:[%s328 + $0x20] sm:$0xff]
        %v858 = vld [vmem:[%s328 + $0x30] sm:$0xff]
        %v859 = vadd.f32 %v851, %v855
        %v860 = vadd.f32 %v852, %v856
        %v861 = vadd.f32 %v853, %v857
        %v862 = vadd.f32 %v854, %v858
        %vm863 = vcmask 392448
        %864 = vst.msk [vmem:[#allocation3] sm:$0xff] %vm863, %v859
        %865 = vst.msk [vmem:[#allocation3 + $0x10] sm:$0xff] %vm863, %v860
        %866 = vst.msk [vmem:[#allocation3 + $0x20] sm:$0xff] %vm863, %v861
        %867 = vst.msk [vmem:[#allocation3 + $0x30] sm:$0xff] %vm863, %v862
        %v868 = vld [vmem:[#allocation2] sm:$0xff]
        %v869 = vld [vmem:[#allocation2 + $0x10] sm:$0xff]
        %v870 = vld [vmem:[#allocation2 + $0x20] sm:$0xff]
        %v871 = vld [vmem:[#allocation2 + $0x30] sm:$0xff]
        %876 = vrot.lane.b32.xlu0 %v859, 16
        %v877 = vpop.permute.xlu0 %876
        %878 = vrot.lane.b32.xlu0 %v860, 16
        %v879 = vpop.permute.xlu0 %878
        %880 = vrot.lane.b32.xlu0 %v861, 16
        %v881 = vpop.permute.xlu0 %880
        %882 = vrot.lane.b32.xlu0 %v862, 16
        %v883 = vpop.permute.xlu0 %882
        %v888 = vmul.f32 %v868, %v877
        %v889 = vmul.f32 %v869, %v879
        %v890 = vmul.f32 %v870, %v881
        %v891 = vmul.f32 %v871, %v883
        %v892 = vld [vmem:[%s328] sm:$0xff]
        %v893 = vld [vmem:[%s328 + $0x10] sm:$0xff]
        %v894 = vld [vmem:[%s328 + $0x20] sm:$0xff]
        %v895 = vld [vmem:[%s328 + $0x30] sm:$0xff]
        %v896 = vadd.f32 %v888, %v892
        %v897 = vadd.f32 %v889, %v893
        %v898 = vadd.f32 %v890, %v894
        %v899 = vadd.f32 %v891, %v895
        %vm900 = vcmask 523648
        %901 = vst.msk [vmem:[#allocation3] sm:$0xff] %vm900, %v896
        %902 = vst.msk [vmem:[#allocation3 + $0x10] sm:$0xff] %vm900, %v897
        %903 = vst.msk [vmem:[#allocation3 + $0x20] sm:$0xff] %vm900, %v898
        %904 = vst.msk [vmem:[#allocation3 + $0x30] sm:$0xff] %vm900, %v899
        %v905 = vld [vmem:[#allocation2] sm:$0xff]
        %v906 = vld [vmem:[#allocation2 + $0x10] sm:$0xff]
        %v907 = vld [vmem:[#allocation2 + $0x20] sm:$0xff]
        %v908 = vld [vmem:[#allocation2 + $0x30] sm:$0xff]
        %913 = vrot.lane.b32.xlu0 %v896, 16
        %v914 = vpop.permute.xlu0 %913
        %915 = vrot.lane.b32.xlu0 %v897, 16
        %v916 = vpop.permute.xlu0 %915
        %917 = vrot.lane.b32.xlu0 %v898, 16
        %v918 = vpop.permute.xlu0 %917
        %919 = vrot.lane.b32.xlu0 %v899, 16
        %v920 = vpop.permute.xlu0 %919
        %v925 = vmul.f32 %v905, %v914
        %v926 = vmul.f32 %v906, %v916
        %v927 = vmul.f32 %v907, %v918
        %v928 = vmul.f32 %v908, %v920
        %v929 = vld [vmem:[%s328] sm:$0xff]
        %v930 = vld [vmem:[%s328 + $0x10] sm:$0xff]
        %v931 = vld [vmem:[%s328 + $0x20] sm:$0xff]
        %v932 = vld [vmem:[%s328 + $0x30] sm:$0xff]
        %v933 = vadd.f32 %v925, %v929
        %v934 = vadd.f32 %v926, %v930
        %v935 = vadd.f32 %v927, %v931
        %v936 = vadd.f32 %v928, %v932
        %vm937 = vcmask 654848
        %938 = vst.msk [vmem:[#allocation3] sm:$0xff] %vm937, %v933
        %939 = vst.msk [vmem:[#allocation3 + $0x10] sm:$0xff] %vm937, %v934
        %940 = vst.msk [vmem:[#allocation3 + $0x20] sm:$0xff] %vm937, %v935
        %941 = vst.msk [vmem:[#allocation3 + $0x30] sm:$0xff] %vm937, %v936
        %v942 = vld [vmem:[#allocation2] sm:$0xff]
        %v943 = vld [vmem:[#allocation2 + $0x10] sm:$0xff]
        %v944 = vld [vmem:[#allocation2 + $0x20] sm:$0xff]
        %v945 = vld [vmem:[#allocation2 + $0x30] sm:$0xff]
        %950 = vrot.lane.b32.xlu0 %v933, 16
        %v951 = vpop.permute.xlu0 %950
        %952 = vrot.lane.b32.xlu0 %v934, 16
        %v953 = vpop.permute.xlu0 %952
        %954 = vrot.lane.b32.xlu0 %v935, 16
        %v955 = vpop.permute.xlu0 %954
        %956 = vrot.lane.b32.xlu0 %v936, 16
        %v957 = vpop.permute.xlu0 %956
        %v962 = vmul.f32 %v942, %v951
        %v963 = vmul.f32 %v943, %v953
        %v964 = vmul.f32 %v944, %v955
        %v965 = vmul.f32 %v945, %v957
        %v966 = vld [vmem:[%s328] sm:$0xff]
        %v967 = vld [vmem:[%s328 + $0x10] sm:$0xff]
        %v968 = vld [vmem:[%s328 + $0x20] sm:$0xff]
        %v969 = vld [vmem:[%s328 + $0x30] sm:$0xff]
        %v970 = vadd.f32 %v962, %v966
        %v971 = vadd.f32 %v963, %v967
        %v972 = vadd.f32 %v964, %v968
        %v973 = vadd.f32 %v965, %v969
        %vm974 = vcmask 786048
        %975 = vst.msk [vmem:[#allocation3] sm:$0xff] %vm974, %v970
        %976 = vst.msk [vmem:[#allocation3 + $0x10] sm:$0xff] %vm974, %v971
        %977 = vst.msk [vmem:[#allocation3 + $0x20] sm:$0xff] %vm974, %v972
        %978 = vst.msk [vmem:[#allocation3 + $0x30] sm:$0xff] %vm974, %v973
        %v979 = vld [vmem:[#allocation2] sm:$0xff]
        %v980 = vld [vmem:[#allocation2 + $0x10] sm:$0xff]
        %v981 = vld [vmem:[#allocation2 + $0x20] sm:$0xff]
        %v982 = vld [vmem:[#allocation2 + $0x30] sm:$0xff]
        %987 = vrot.lane.b32.xlu0 %v970, 16
        %v988 = vpop.permute.xlu0 %987
        %989 = vrot.lane.b32.xlu0 %v971, 16
        %v990 = vpop.permute.xlu0 %989
        %991 = vrot.lane.b32.xlu0 %v972, 16
        %v992 = vpop.permute.xlu0 %991
        %993 = vrot.lane.b32.xlu0 %v973, 16
        %v994 = vpop.permute.xlu0 %993
        %v999 = vmul.f32 %v979, %v988
        %v1000 = vmul.f32 %v980, %v990
        %v1001 = vmul.f32 %v981, %v992
        %v1002 = vmul.f32 %v982, %v994
        %v1003 = vld [vmem:[%s328] sm:$0xff]
        %v1004 = vld [vmem:[%s328 + $0x10] sm:$0xff]
        %v1005 = vld [vmem:[%s328 + $0x20] sm:$0xff]
        %v1006 = vld [vmem:[%s328 + $0x30] sm:$0xff]
        %v1007 = vadd.f32 %v999, %v1003
        %v1008 = vadd.f32 %v1000, %v1004
        %v1009 = vadd.f32 %v1001, %v1005
        %v1010 = vadd.f32 %v1002, %v1006
        %vm1011 = vcmask 917248
        %1012 = vst.msk [vmem:[#allocation3] sm:$0xff] %vm1011, %v1007
        %1013 = vst.msk [vmem:[#allocation3 + $0x10] sm:$0xff] %vm1011, %v1008
        %1014 = vst.msk [vmem:[#allocation3 + $0x20] sm:$0xff] %vm1011, %v1009
        %1015 = vst.msk [vmem:[#allocation3 + $0x30] sm:$0xff] %vm1011, %v1010
        %v1016 = vld [vmem:[#allocation2] sm:$0xff]
        %v1017 = vld [vmem:[#allocation2 + $0x10] sm:$0xff]
        %v1018 = vld [vmem:[#allocation2 + $0x20] sm:$0xff]
        %v1019 = vld [vmem:[#allocation2 + $0x30] sm:$0xff]
        %1024 = vrot.lane.b32.xlu0 %v1007, 16
        %v1025 = vpop.permute.xlu0 %1024
        %1026 = vrot.lane.b32.xlu0 %v1008, 16
        %v1027 = vpop.permute.xlu0 %1026
        %1028 = vrot.lane.b32.xlu0 %v1009, 16
        %v1029 = vpop.permute.xlu0 %1028
        %1030 = vrot.lane.b32.xlu0 %v1010, 16
        %v1031 = vpop.permute.xlu0 %1030
        %v1036 = vmul.f32 %v1016, %v1025
        %v1037 = vmul.f32 %v1017, %v1027
        %v1038 = vmul.f32 %v1018, %v1029
        %v1039 = vmul.f32 %v1019, %v1031
        %v1040 = vld [vmem:[%s328] sm:$0xff]
        %v1041 = vld [vmem:[%s328 + $0x10] sm:$0xff]
        %v1042 = vld [vmem:[%s328 + $0x20] sm:$0xff]
        %v1043 = vld [vmem:[%s328 + $0x30] sm:$0xff]
        %v1044 = vadd.f32 %v1036, %v1040
        %v1045 = vadd.f32 %v1037, %v1041
        %v1046 = vadd.f32 %v1038, %v1042
        %v1047 = vadd.f32 %v1039, %v1043
        %vm1048 = vcmask 1048448
        %1049 = vst.msk [vmem:[#allocation3] sm:$0xff] %vm1048, %v1044
        %1050 = vst.msk [vmem:[#allocation3 + $0x10] sm:$0xff] %vm1048, %v1045
        %1051 = vst.msk [vmem:[#allocation3 + $0x20] sm:$0xff] %vm1048, %v1046
        %1052 = vst.msk [vmem:[#allocation3 + $0x30] sm:$0xff] %vm1048, %v1047
        %v1053 = vld [vmem:[#allocation2 + $0x8] sm:$0xff]
        %v1054 = vld [vmem:[#allocation2 + $0x18] sm:$0xff]
        %v1055 = vld [vmem:[#allocation2 + $0x28] sm:$0xff]
        %v1056 = vld [vmem:[#allocation2 + $0x38] sm:$0xff]
        %1061 = vrot.lane.b32.xlu0 %v1044, 16
        %v1062 = vpop.permute.xlu0 %1061
        %1063 = vrot.lane.b32.xlu0 %v1045, 16
        %v1064 = vpop.permute.xlu0 %1063
        %1065 = vrot.lane.b32.xlu0 %v1046, 16
        %v1066 = vpop.permute.xlu0 %1065
        %1067 = vrot.lane.b32.xlu0 %v1047, 16
        %v1068 = vpop.permute.xlu0 %1067
        %v1073 = vmul.f32 %v1053, %v1062
        %v1074 = vmul.f32 %v1054, %v1064
        %v1075 = vmul.f32 %v1055, %v1066
        %v1076 = vmul.f32 %v1056, %v1068
        %v1077 = vld [vmem:[%s328 + $0x8] sm:$0xff]
        %v1078 = vld [vmem:[%s328 + $0x18] sm:$0xff]
        %v1079 = vld [vmem:[%s328 + $0x28] sm:$0xff]
        %v1080 = vld [vmem:[%s328 + $0x38] sm:$0xff]
        %v1081 = vadd.f32 %v1073, %v1077
        %v1082 = vadd.f32 %v1074, %v1078
        %v1083 = vadd.f32 %v1075, %v1079
        %v1084 = vadd.f32 %v1076, %v1080
        %1085 = vst.msk [vmem:[#allocation3 + $0x8] sm:$0xff] %vm789, %v1081
        %1086 = vst.msk [vmem:[#allocation3 + $0x18] sm:$0xff] %vm789, %v1082
        %1087 = vst.msk [vmem:[#allocation3 + $0x28] sm:$0xff] %vm789, %v1083
        %1088 = vst.msk [vmem:[#allocation3 + $0x38] sm:$0xff] %vm789, %v1084
        %v1089 = vld [vmem:[#allocation2 + $0x8] sm:$0xff]
        %v1090 = vld [vmem:[#allocation2 + $0x18] sm:$0xff]
        %v1091 = vld [vmem:[#allocation2 + $0x28] sm:$0xff]
        %v1092 = vld [vmem:[#allocation2 + $0x38] sm:$0xff]
        %1097 = vrot.lane.b32.xlu0 %v1081, 16
        %v1098 = vpop.permute.xlu0 %1097
        %1099 = vrot.lane.b32.xlu0 %v1082, 16
        %v1100 = vpop.permute.xlu0 %1099
        %1101 = vrot.lane.b32.xlu0 %v1083, 16
        %v1102 = vpop.permute.xlu0 %1101
        %1103 = vrot.lane.b32.xlu0 %v1084, 16
        %v1104 = vpop.permute.xlu0 %1103
        %v1109 = vmul.f32 %v1089, %v1098
        %v1110 = vmul.f32 %v1090, %v1100
        %v1111 = vmul.f32 %v1091, %v1102
        %v1112 = vmul.f32 %v1092, %v1104
        %v1113 = vld [vmem:[%s328 + $0x8] sm:$0xff]
        %v1114 = vld [vmem:[%s328 + $0x18] sm:$0xff]
        %v1115 = vld [vmem:[%s328 + $0x28] sm:$0xff]
        %v1116 = vld [vmem:[%s328 + $0x38] sm:$0xff]
        %v1117 = vadd.f32 %v1109, %v1113
        %v1118 = vadd.f32 %v1110, %v1114
        %v1119 = vadd.f32 %v1111, %v1115
        %v1120 = vadd.f32 %v1112, %v1116
        %1121 = vst.msk [vmem:[#allocation3 + $0x8] sm:$0xff] %vm826, %v1117
        %1122 = vst.msk [vmem:[#allocation3 + $0x18] sm:$0xff] %vm826, %v1118
        %1123 = vst.msk [vmem:[#allocation3 + $0x28] sm:$0xff] %vm826, %v1119
        %1124 = vst.msk [vmem:[#allocation3 + $0x38] sm:$0xff] %vm826, %v1120
        %v1125 = vld [vmem:[#allocation2 + $0x8] sm:$0xff]
        %v1126 = vld [vmem:[#allocation2 + $0x18] sm:$0xff]
        %v1127 = vld [vmem:[#allocation2 + $0x28] sm:$0xff]
        %v1128 = vld [vmem:[#allocation2 + $0x38] sm:$0xff]
        %1133 = vrot.lane.b32.xlu0 %v1117, 16
        %v1134 = vpop.permute.xlu0 %1133
        %1135 = vrot.lane.b32.xlu0 %v1118, 16
        %v1136 = vpop.permute.xlu0 %1135
        %1137 = vrot.lane.b32.xlu0 %v1119, 16
        %v1138 = vpop.permute.xlu0 %1137
        %1139 = vrot.lane.b32.xlu0 %v1120, 16
        %v1140 = vpop.permute.xlu0 %1139
        %v1145 = vmul.f32 %v1125, %v1134
        %v1146 = vmul.f32 %v1126, %v1136
        %v1147 = vmul.f32 %v1127, %v1138
        %v1148 = vmul.f32 %v1128, %v1140
        %v1149 = vld [vmem:[%s328 + $0x8] sm:$0xff]
        %v1150 = vld [vmem:[%s328 + $0x18] sm:$0xff]
        %v1151 = vld [vmem:[%s328 + $0x28] sm:$0xff]
        %v1152 = vld [vmem:[%s328 + $0x38] sm:$0xff]
        %v1153 = vadd.f32 %v1145, %v1149
        %v1154 = vadd.f32 %v1146, %v1150
        %v1155 = vadd.f32 %v1147, %v1151
        %v1156 = vadd.f32 %v1148, %v1152
        %1157 = vst.msk [vmem:[#allocation3 + $0x8] sm:$0xff] %vm863, %v1153
        %1158 = vst.msk [vmem:[#allocation3 + $0x18] sm:$0xff] %vm863, %v1154
        %1159 = vst.msk [vmem:[#allocation3 + $0x28] sm:$0xff] %vm863, %v1155
        %1160 = vst.msk [vmem:[#allocation3 + $0x38] sm:$0xff] %vm863, %v1156
        %v1161 = vld [vmem:[#allocation2 + $0x8] sm:$0xff]
        %v1162 = vld [vmem:[#allocation2 + $0x18] sm:$0xff]
        %v1163 = vld [vmem:[#allocation2 + $0x28] sm:$0xff]
        %v1164 = vld [vmem:[#allocation2 + $0x38] sm:$0xff]
        %1169 = vrot.lane.b32.xlu0 %v1153, 16
        %v1170 = vpop.permute.xlu0 %1169
        %1171 = vrot.lane.b32.xlu0 %v1154, 16
        %v1172 = vpop.permute.xlu0 %1171
        %1173 = vrot.lane.b32.xlu0 %v1155, 16
        %v1174 = vpop.permute.xlu0 %1173
        %1175 = vrot.lane.b32.xlu0 %v1156, 16
        %v1176 = vpop.permute.xlu0 %1175
        %v1181 = vmul.f32 %v1161, %v1170
        %v1182 = vmul.f32 %v1162, %v1172
        %v1183 = vmul.f32 %v1163, %v1174
        %v1184 = vmul.f32 %v1164, %v1176
        %v1185 = vld [vmem:[%s328 + $0x8] sm:$0xff]
        %v1186 = vld [vmem:[%s328 + $0x18] sm:$0xff]
        %v1187 = vld [vmem:[%s328 + $0x28] sm:$0xff]
        %v1188 = vld [vmem:[%s328 + $0x38] sm:$0xff]
        %v1189 = vadd.f32 %v1181, %v1185
        %v1190 = vadd.f32 %v1182, %v1186
        %v1191 = vadd.f32 %v1183, %v1187
        %v1192 = vadd.f32 %v1184, %v1188
        %1193 = vst.msk [vmem:[#allocation3 + $0x8] sm:$0xff] %vm900, %v1189
        %1194 = vst.msk [vmem:[#allocation3 + $0x18] sm:$0xff] %vm900, %v1190
        %1195 = vst.msk [vmem:[#allocation3 + $0x28] sm:$0xff] %vm900, %v1191
        %1196 = vst.msk [vmem:[#allocation3 + $0x38] sm:$0xff] %vm900, %v1192
        %v1197 = vld [vmem:[#allocation2 + $0x8] sm:$0xff]
        %v1198 = vld [vmem:[#allocation2 + $0x18] sm:$0xff]
        %v1199 = vld [vmem:[#allocation2 + $0x28] sm:$0xff]
        %v1200 = vld [vmem:[#allocation2 + $0x38] sm:$0xff]
        %1205 = vrot.lane.b32.xlu0 %v1189, 16
        %v1206 = vpop.permute.xlu0 %1205
        %1207 = vrot.lane.b32.xlu0 %v1190, 16
        %v1208 = vpop.permute.xlu0 %1207
        %1209 = vrot.lane.b32.xlu0 %v1191, 16
        %v1210 = vpop.permute.xlu0 %1209
        %1211 = vrot.lane.b32.xlu0 %v1192, 16
        %v1212 = vpop.permute.xlu0 %1211
        %v1217 = vmul.f32 %v1197, %v1206
        %v1218 = vmul.f32 %v1198, %v1208
        %v1219 = vmul.f32 %v1199, %v1210
        %v1220 = vmul.f32 %v1200, %v1212
        %v1221 = vld [vmem:[%s328 + $0x8] sm:$0xff]
        %v1222 = vld [vmem:[%s328 + $0x18] sm:$0xff]
        %v1223 = vld [vmem:[%s328 + $0x28] sm:$0xff]
        %v1224 = vld [vmem:[%s328 + $0x38] sm:$0xff]
        %v1225 = vadd.f32 %v1217, %v1221
        %v1226 = vadd.f32 %v1218, %v1222
        %v1227 = vadd.f32 %v1219, %v1223
        %v1228 = vadd.f32 %v1220, %v1224
        %1229 = vst.msk [vmem:[#allocation3 + $0x8] sm:$0xff] %vm937, %v1225
        %1230 = vst.msk [vmem:[#allocation3 + $0x18] sm:$0xff] %vm937, %v1226
        %1231 = vst.msk [vmem:[#allocation3 + $0x28] sm:$0xff] %vm937, %v1227
        %1232 = vst.msk [vmem:[#allocation3 + $0x38] sm:$0xff] %vm937, %v1228
        %v1233 = vld [vmem:[#allocation2 + $0x8] sm:$0xff]
        %v1234 = vld [vmem:[#allocation2 + $0x18] sm:$0xff]
        %v1235 = vld [vmem:[#allocation2 + $0x28] sm:$0xff]
        %v1236 = vld [vmem:[#allocation2 + $0x38] sm:$0xff]
        %1241 = vrot.lane.b32.xlu0 %v1225, 16
        %v1242 = vpop.permute.xlu0 %1241
        %1243 = vrot.lane.b32.xlu0 %v1226, 16
        %v1244 = vpop.permute.xlu0 %1243
        %1245 = vrot.lane.b32.xlu0 %v1227, 16
        %v1246 = vpop.permute.xlu0 %1245
        %1247 = vrot.lane.b32.xlu0 %v1228, 16
        %v1248 = vpop.permute.xlu0 %1247
        %v1253 = vmul.f32 %v1233, %v1242
        %v1254 = vmul.f32 %v1234, %v1244
        %v1255 = vmul.f32 %v1235, %v1246
        %v1256 = vmul.f32 %v1236, %v1248
        %v1257 = vld [vmem:[%s328 + $0x8] sm:$0xff]
        %v1258 = vld [vmem:[%s328 + $0x18] sm:$0xff]
        %v1259 = vld [vmem:[%s328 + $0x28] sm:$0xff]
        %v1260 = vld [vmem:[%s328 + $0x38] sm:$0xff]
        %v1261 = vadd.f32 %v1253, %v1257
        %v1262 = vadd.f32 %v1254, %v1258
        %v1263 = vadd.f32 %v1255, %v1259
        %v1264 = vadd.f32 %v1256, %v1260
        %1265 = vst.msk [vmem:[#allocation3 + $0x8] sm:$0xff] %vm974, %v1261
        %1266 = vst.msk [vmem:[#allocation3 + $0x18] sm:$0xff] %vm974, %v1262
        %1267 = vst.msk [vmem:[#allocation3 + $0x28] sm:$0xff] %vm974, %v1263
        %1268 = vst.msk [vmem:[#allocation3 + $0x38] sm:$0xff] %vm974, %v1264
        %v1269 = vld [vmem:[#allocation2 + $0x8] sm:$0xff]
        %v1270 = vld [vmem:[#allocation2 + $0x18] sm:$0xff]
        %v1271 = vld [vmem:[#allocation2 + $0x28] sm:$0xff]
        %v1272 = vld [vmem:[#allocation2 + $0x38] sm:$0xff]
        %1277 = vrot.lane.b32.xlu0 %v1261, 16
        %v1278 = vpop.permute.xlu0 %1277
        %1279 = vrot.lane.b32.xlu0 %v1262, 16
        %v1280 = vpop.permute.xlu0 %1279
        %1281 = vrot.lane.b32.xlu0 %v1263, 16
        %v1282 = vpop.permute.xlu0 %1281
        %1283 = vrot.lane.b32.xlu0 %v1264, 16
        %v1284 = vpop.permute.xlu0 %1283
        %v1289 = vmul.f32 %v1269, %v1278
        %v1290 = vmul.f32 %v1270, %v1280
        %v1291 = vmul.f32 %v1271, %v1282
        %v1292 = vmul.f32 %v1272, %v1284
        %v1293 = vld [vmem:[%s328 + $0x8] sm:$0xff]
        %v1294 = vld [vmem:[%s328 + $0x18] sm:$0xff]
        %v1295 = vld [vmem:[%s328 + $0x28] sm:$0xff]
        %v1296 = vld [vmem:[%s328 + $0x38] sm:$0xff]
        %v1297 = vadd.f32 %v1289, %v1293
        %v1298 = vadd.f32 %v1290, %v1294
        %v1299 = vadd.f32 %v1291, %v1295
        %v1300 = vadd.f32 %v1292, %v1296
        %1301 = vst.msk [vmem:[#allocation3 + $0x8] sm:$0xff] %vm1011, %v1297
        %1302 = vst.msk [vmem:[#allocation3 + $0x18] sm:$0xff] %vm1011, %v1298
        %1303 = vst.msk [vmem:[#allocation3 + $0x28] sm:$0xff] %vm1011, %v1299
        %1304 = vst.msk [vmem:[#allocation3 + $0x38] sm:$0xff] %vm1011, %v1300
        %v1305 = vld [vmem:[#allocation2 + $0x8] sm:$0xff]
        %v1306 = vld [vmem:[#allocation2 + $0x18] sm:$0xff]
        %v1307 = vld [vmem:[#allocation2 + $0x28] sm:$0xff]
        %v1308 = vld [vmem:[#allocation2 + $0x38] sm:$0xff]
        %1313 = vrot.lane.b32.xlu0 %v1297, 16
        %v1314 = vpop.permute.xlu0 %1313
        %1315 = vrot.lane.b32.xlu0 %v1298, 16
        %v1316 = vpop.permute.xlu0 %1315
        %1317 = vrot.lane.b32.xlu0 %v1299, 16
        %v1318 = vpop.permute.xlu0 %1317
        %1319 = vrot.lane.b32.xlu0 %v1300, 16
        %v1320 = vpop.permute.xlu0 %1319
        %v1325 = vmul.f32 %v1305, %v1314
        %v1326 = vmul.f32 %v1306, %v1316
        %v1327 = vmul.f32 %v1307, %v1318
        %v1328 = vmul.f32 %v1308, %v1320
        %v1329 = vld [vmem:[%s328 + $0x8] sm:$0xff]
        %v1330 = vld [vmem:[%s328 + $0x18] sm:$0xff]
        %v1331 = vld [vmem:[%s328 + $0x28] sm:$0xff]
        %v1332 = vld [vmem:[%s328 + $0x38] sm:$0xff]
        %v1333 = vadd.f32 %v1325, %v1329
        %v1334 = vadd.f32 %v1326, %v1330
        %v1335 = vadd.f32 %v1327, %v1331
        %v1336 = vadd.f32 %v1328, %v1332
        %1337 = vst.msk [vmem:[#allocation3 + $0x8] sm:$0xff] %vm1048, %v1333
        %1338 = vst.msk [vmem:[#allocation3 + $0x18] sm:$0xff] %vm1048, %v1334
        %1339 = vst.msk [vmem:[#allocation3 + $0x28] sm:$0xff] %vm1048, %v1335
        %1340 = vst.msk [vmem:[#allocation3 + $0x38] sm:$0xff] %vm1048, %v1336
        %v1341 = vld [vmem:[#allocation2 + $0x8] sm:$0xff]
        %v1342 = vld [vmem:[#allocation2 + $0x18] sm:$0xff]
        %v1343 = vld [vmem:[#allocation2 + $0x28] sm:$0xff]
        %v1344 = vld [vmem:[#allocation2 + $0x38] sm:$0xff]
        %v1345 = vmul.f32 %v1341, 0.0
        %v1346 = vmul.f32 %v1342, 0.0
        %v1347 = vmul.f32 %v1343, 0.0
        %v1348 = vmul.f32 %v1344, 0.0
        %v1349 = vld [vmem:[%s328 + $0x8] sm:$0xff]
        %v1350 = vld [vmem:[%s328 + $0x18] sm:$0xff]
        %v1351 = vld [vmem:[%s328 + $0x28] sm:$0xff]
        %v1352 = vld [vmem:[%s328 + $0x38] sm:$0xff]
        %v1353 = vadd.f32 %v1345, %v1349
        %v1354 = vadd.f32 %v1346, %v1350
        %v1355 = vadd.f32 %v1347, %v1351
        %v1356 = vadd.f32 %v1348, %v1352
        %v1357 = vld [vmem:[#allocation3 + $0x8] sm:$0xff]
        %v1358 = vld [vmem:[#allocation3 + $0x18] sm:$0xff]
        %v1359 = vld [vmem:[#allocation3 + $0x28] sm:$0xff]
        %v1360 = vld [vmem:[#allocation3 + $0x38] sm:$0xff]
        %v1361 = vadd.f32 %v1357, %v1353
        %v1362 = vadd.f32 %v1358, %v1354
        %v1363 = vadd.f32 %v1359, %v1355
        %v1364 = vadd.f32 %v1360, %v1356
        %1365 = vst.msk [vmem:[%s335 + $0x8] sm:$0xff] %vm1048, %v1361
        %1366 = vst.msk [vmem:[%s335 + $0x18] sm:$0xff] %vm1048, %v1362
        %1367 = vst.msk [vmem:[%s335 + $0x28] sm:$0xff] %vm1048, %v1363
        %1368 = vst.msk [vmem:[%s335 + $0x38] sm:$0xff] %vm1048, %v1364
        %v1369 = vld [vmem:[#allocation2 + $0x8] sm:$0xff]
        %v1370 = vld [vmem:[#allocation2 + $0x18] sm:$0xff]
        %v1371 = vld [vmem:[#allocation2 + $0x28] sm:$0xff]
        %v1372 = vld [vmem:[#allocation2 + $0x38] sm:$0xff]
        %1377 = vrot.lane.b32.xlu0 %v1353, 112
        %v1378 = vpop.permute.xlu0 %1377
        %1379 = vrot.lane.b32.xlu0 %v1354, 112
        %v1380 = vpop.permute.xlu0 %1379
        %1381 = vrot.lane.b32.xlu0 %v1355, 112
        %v1382 = vpop.permute.xlu0 %1381
        %1383 = vrot.lane.b32.xlu0 %v1356, 112
        %v1384 = vpop.permute.xlu0 %1383
        %v1389 = vmul.f32 %v1369, %v1378
        %v1390 = vmul.f32 %v1370, %v1380
        %v1391 = vmul.f32 %v1371, %v1382
        %v1392 = vmul.f32 %v1372, %v1384
        %v1393 = vld [vmem:[%s328 + $0x8] sm:$0xff]
        %v1394 = vld [vmem:[%s328 + $0x18] sm:$0xff]
        %v1395 = vld [vmem:[%s328 + $0x28] sm:$0xff]
        %v1396 = vld [vmem:[%s328 + $0x38] sm:$0xff]
        %v1397 = vadd.f32 %v1389, %v1393
        %v1398 = vadd.f32 %v1390, %v1394
        %v1399 = vadd.f32 %v1391, %v1395
        %v1400 = vadd.f32 %v1392, %v1396
        %v1401 = vld [vmem:[#allocation3 + $0x8] sm:$0xff]
        %v1402 = vld [vmem:[#allocation3 + $0x18] sm:$0xff]
        %v1403 = vld [vmem:[#allocation3 + $0x28] sm:$0xff]
        %v1404 = vld [vmem:[#allocation3 + $0x38] sm:$0xff]
        %v1405 = vadd.f32 %v1401, %v1397
        %v1406 = vadd.f32 %v1402, %v1398
        %v1407 = vadd.f32 %v1403, %v1399
        %v1408 = vadd.f32 %v1404, %v1400
        %1409 = vst.msk [vmem:[%s335 + $0x8] sm:$0xff] %vm1011, %v1405
        %1410 = vst.msk [vmem:[%s335 + $0x18] sm:$0xff] %vm1011, %v1406
        %1411 = vst.msk [vmem:[%s335 + $0x28] sm:$0xff] %vm1011, %v1407
        %1412 = vst.msk [vmem:[%s335 + $0x38] sm:$0xff] %vm1011, %v1408
        %v1413 = vld [vmem:[#allocation2 + $0x8] sm:$0xff]
        %v1414 = vld [vmem:[#allocation2 + $0x18] sm:$0xff]
        %v1415 = vld [vmem:[#allocation2 + $0x28] sm:$0xff]
        %v1416 = vld [vmem:[#allocation2 + $0x38] sm:$0xff]
        %1421 = vrot.lane.b32.xlu0 %v1397, 112
        %v1422 = vpop.permute.xlu0 %1421
        %1423 = vrot.lane.b32.xlu0 %v1398, 112
        %v1424 = vpop.permute.xlu0 %1423
        %1425 = vrot.lane.b32.xlu0 %v1399, 112
        %v1426 = vpop.permute.xlu0 %1425
        %1427 = vrot.lane.b32.xlu0 %v1400, 112
        %v1428 = vpop.permute.xlu0 %1427
        %v1433 = vmul.f32 %v1413, %v1422
        %v1434 = vmul.f32 %v1414, %v1424
        %v1435 = vmul.f32 %v1415, %v1426
        %v1436 = vmul.f32 %v1416, %v1428
        %v1437 = vld [vmem:[%s328 + $0x8] sm:$0xff]
        %v1438 = vld [vmem:[%s328 + $0x18] sm:$0xff]
        %v1439 = vld [vmem:[%s328 + $0x28] sm:$0xff]
        %v1440 = vld [vmem:[%s328 + $0x38] sm:$0xff]
        %v1441 = vadd.f32 %v1433, %v1437
        %v1442 = vadd.f32 %v1434, %v1438
        %v1443 = vadd.f32 %v1435, %v1439
        %v1444 = vadd.f32 %v1436, %v1440
        %v1445 = vld [vmem:[#allocation3 + $0x8] sm:$0xff]
        %v1446 = vld [vmem:[#allocation3 + $0x18] sm:$0xff]
        %v1447 = vld [vmem:[#allocation3 + $0x28] sm:$0xff]
        %v1448 = vld [vmem:[#allocation3 + $0x38] sm:$0xff]
        %v1449 = vadd.f32 %v1445, %v1441
        %v1450 = vadd.f32 %v1446, %v1442
        %v1451 = vadd.f32 %v1447, %v1443
        %v1452 = vadd.f32 %v1448, %v1444
        %1453 = vst.msk [vmem:[%s335 + $0x8] sm:$0xff] %vm974, %v1449
        %1454 = vst.msk [vmem:[%s335 + $0x18] sm:$0xff] %vm974, %v1450
        %1455 = vst.msk [vmem:[%s335 + $0x28] sm:$0xff] %vm974, %v1451
        %1456 = vst.msk [vmem:[%s335 + $0x38] sm:$0xff] %vm974, %v1452
        %v1457 = vld [vmem:[#allocation2 + $0x8] sm:$0xff]
        %v1458 = vld [vmem:[#allocation2 + $0x18] sm:$0xff]
        %v1459 = vld [vmem:[#allocation2 + $0x28] sm:$0xff]
        %v1460 = vld [vmem:[#allocation2 + $0x38] sm:$0xff]
        %1465 = vrot.lane.b32.xlu0 %v1441, 112
        %v1466 = vpop.permute.xlu0 %1465
        %1467 = vrot.lane.b32.xlu0 %v1442, 112
        %v1468 = vpop.permute.xlu0 %1467
        %1469 = vrot.lane.b32.xlu0 %v1443, 112
        %v1470 = vpop.permute.xlu0 %1469
        %1471 = vrot.lane.b32.xlu0 %v1444, 112
        %v1472 = vpop.permute.xlu0 %1471
        %v1477 = vmul.f32 %v1457, %v1466
        %v1478 = vmul.f32 %v1458, %v1468
        %v1479 = vmul.f32 %v1459, %v1470
        %v1480 = vmul.f32 %v1460, %v1472
        %v1481 = vld [vmem:[%s328 + $0x8] sm:$0xff]
        %v1482 = vld [vmem:[%s328 + $0x18] sm:$0xff]
        %v1483 = vld [vmem:[%s328 + $0x28] sm:$0xff]
        %v1484 = vld [vmem:[%s328 + $0x38] sm:$0xff]
        %v1485 = vadd.f32 %v1477, %v1481
        %v1486 = vadd.f32 %v1478, %v1482
        %v1487 = vadd.f32 %v1479, %v1483
        %v1488 = vadd.f32 %v1480, %v1484
        %v1489 = vld [vmem:[#allocation3 + $0x8] sm:$0xff]
        %v1490 = vld [vmem:[#allocation3 + $0x18] sm:$0xff]
        %v1491 = vld [vmem:[#allocation3 + $0x28] sm:$0xff]
        %v1492 = vld [vmem:[#allocation3 + $0x38] sm:$0xff]
        %v1493 = vadd.f32 %v1489, %v1485
        %v1494 = vadd.f32 %v1490, %v1486
        %v1495 = vadd.f32 %v1491, %v1487
        %v1496 = vadd.f32 %v1492, %v1488
        %1497 = vst.msk [vmem:[%s335 + $0x8] sm:$0xff] %vm937, %v1493
        %1498 = vst.msk [vmem:[%s335 + $0x18] sm:$0xff] %vm937, %v1494
        %1499 = vst.msk [vmem:[%s335 + $0x28] sm:$0xff] %vm937, %v1495
        %1500 = vst.msk [vmem:[%s335 + $0x38] sm:$0xff] %vm937, %v1496
        %v1501 = vld [vmem:[#allocation2 + $0x8] sm:$0xff]
        %v1502 = vld [vmem:[#allocation2 + $0x18] sm:$0xff]
        %v1503 = vld [vmem:[#allocation2 + $0x28] sm:$0xff]
        %v1504 = vld [vmem:[#allocation2 + $0x38] sm:$0xff]
        %1509 = vrot.lane.b32.xlu0 %v1485, 112
        %v1510 = vpop.permute.xlu0 %1509
        %1511 = vrot.lane.b32.xlu0 %v1486, 112
        %v1512 = vpop.permute.xlu0 %1511
        %1513 = vrot.lane.b32.xlu0 %v1487, 112
        %v1514 = vpop.permute.xlu0 %1513
        %1515 = vrot.lane.b32.xlu0 %v1488, 112
        %v1516 = vpop.permute.xlu0 %1515
        %v1521 = vmul.f32 %v1501, %v1510
        %v1522 = vmul.f32 %v1502, %v1512
        %v1523 = vmul.f32 %v1503, %v1514
        %v1524 = vmul.f32 %v1504, %v1516
        %v1525 = vld [vmem:[%s328 + $0x8] sm:$0xff]
        %v1526 = vld [vmem:[%s328 + $0x18] sm:$0xff]
        %v1527 = vld [vmem:[%s328 + $0x28] sm:$0xff]
        %v1528 = vld [vmem:[%s328 + $0x38] sm:$0xff]
        %v1529 = vadd.f32 %v1521, %v1525
        %v1530 = vadd.f32 %v1522, %v1526
        %v1531 = vadd.f32 %v1523, %v1527
        %v1532 = vadd.f32 %v1524, %v1528
        %v1533 = vld [vmem:[#allocation3 + $0x8] sm:$0xff]
        %v1534 = vld [vmem:[#allocation3 + $0x18] sm:$0xff]
        %v1535 = vld [vmem:[#allocation3 + $0x28] sm:$0xff]
        %v1536 = vld [vmem:[#allocation3 + $0x38] sm:$0xff]
        %v1537 = vadd.f32 %v1533, %v1529
        %v1538 = vadd.f32 %v1534, %v1530
        %v1539 = vadd.f32 %v1535, %v1531
        %v1540 = vadd.f32 %v1536, %v1532
        %1541 = vst.msk [vmem:[%s335 + $0x8] sm:$0xff] %vm900, %v1537
        %1542 = vst.msk [vmem:[%s335 + $0x18] sm:$0xff] %vm900, %v1538
        %1543 = vst.msk [vmem:[%s335 + $0x28] sm:$0xff] %vm900, %v1539
        %1544 = vst.msk [vmem:[%s335 + $0x38] sm:$0xff] %vm900, %v1540
        %v1545 = vld [vmem:[#allocation2 + $0x8] sm:$0xff]
        %v1546 = vld [vmem:[#allocation2 + $0x18] sm:$0xff]
        %v1547 = vld [vmem:[#allocation2 + $0x28] sm:$0xff]
        %v1548 = vld [vmem:[#allocation2 + $0x38] sm:$0xff]
        %1553 = vrot.lane.b32.xlu0 %v1529, 112
        %v1554 = vpop.permute.xlu0 %1553
        %1555 = vrot.lane.b32.xlu0 %v1530, 112
        %v1556 = vpop.permute.xlu0 %1555
        %1557 = vrot.lane.b32.xlu0 %v1531, 112
        %v1558 = vpop.permute.xlu0 %1557
        %1559 = vrot.lane.b32.xlu0 %v1532, 112
        %v1560 = vpop.permute.xlu0 %1559
        %v1565 = vmul.f32 %v1545, %v1554
        %v1566 = vmul.f32 %v1546, %v1556
        %v1567 = vmul.f32 %v1547, %v1558
        %v1568 = vmul.f32 %v1548, %v1560
        %v1569 = vld [vmem:[%s328 + $0x8] sm:$0xff]
        %v1570 = vld [vmem:[%s328 + $0x18] sm:$0xff]
        %v1571 = vld [vmem:[%s328 + $0x28] sm:$0xff]
        %v1572 = vld [vmem:[%s328 + $0x38] sm:$0xff]
        %v1573 = vadd.f32 %v1565, %v1569
        %v1574 = vadd.f32 %v1566, %v1570
        %v1575 = vadd.f32 %v1567, %v1571
        %v1576 = vadd.f32 %v1568, %v1572
        %v1577 = vld [vmem:[#allocation3 + $0x8] sm:$0xff]
        %v1578 = vld [vmem:[#allocation3 + $0x18] sm:$0xff]
        %v1579 = vld [vmem:[#allocation3 + $0x28] sm:$0xff]
        %v1580 = vld [vmem:[#allocation3 + $0x38] sm:$0xff]
        %v1581 = vadd.f32 %v1577, %v1573
        %v1582 = vadd.f32 %v1578, %v1574
        %v1583 = vadd.f32 %v1579, %v1575
        %v1584 = vadd.f32 %v1580, %v1576
        %1585 = vst.msk [vmem:[%s335 + $0x8] sm:$0xff] %vm863, %v1581
        %1586 = vst.msk [vmem:[%s335 + $0x18] sm:$0xff] %vm863, %v1582
        %1587 = vst.msk [vmem:[%s335 + $0x28] sm:$0xff] %vm863, %v1583
        %1588 = vst.msk [vmem:[%s335 + $0x38] sm:$0xff] %vm863, %v1584
        %v1589 = vld [vmem:[#allocation2 + $0x8] sm:$0xff]
        %v1590 = vld [vmem:[#allocation2 + $0x18] sm:$0xff]
        %v1591 = vld [vmem:[#allocation2 + $0x28] sm:$0xff]
        %v1592 = vld [vmem:[#allocation2 + $0x38] sm:$0xff]
        %1597 = vrot.lane.b32.xlu0 %v1573, 112
        %v1598 = vpop.permute.xlu0 %1597
        %1599 = vrot.lane.b32.xlu0 %v1574, 112
        %v1600 = vpop.permute.xlu0 %1599
        %1601 = vrot.lane.b32.xlu0 %v1575, 112
        %v1602 = vpop.permute.xlu0 %1601
        %1603 = vrot.lane.b32.xlu0 %v1576, 112
        %v1604 = vpop.permute.xlu0 %1603
        %v1609 = vmul.f32 %v1589, %v1598
        %v1610 = vmul.f32 %v1590, %v1600
        %v1611 = vmul.f32 %v1591, %v1602
        %v1612 = vmul.f32 %v1592, %v1604
        %v1613 = vld [vmem:[%s328 + $0x8] sm:$0xff]
        %v1614 = vld [vmem:[%s328 + $0x18] sm:$0xff]
        %v1615 = vld [vmem:[%s328 + $0x28] sm:$0xff]
        %v1616 = vld [vmem:[%s328 + $0x38] sm:$0xff]
        %v1617 = vadd.f32 %v1609, %v1613
        %v1618 = vadd.f32 %v1610, %v1614
        %v1619 = vadd.f32 %v1611, %v1615
        %v1620 = vadd.f32 %v1612, %v1616
        %v1621 = vld [vmem:[#allocation3 + $0x8] sm:$0xff]
        %v1622 = vld [vmem:[#allocation3 + $0x18] sm:$0xff]
        %v1623 = vld [vmem:[#allocation3 + $0x28] sm:$0xff]
        %v1624 = vld [vmem:[#allocation3 + $0x38] sm:$0xff]
        %v1625 = vadd.f32 %v1621, %v1617
        %v1626 = vadd.f32 %v1622, %v1618
        %v1627 = vadd.f32 %v1623, %v1619
        %v1628 = vadd.f32 %v1624, %v1620
        %1629 = vst.msk [vmem:[%s335 + $0x8] sm:$0xff] %vm826, %v1625
        %1630 = vst.msk [vmem:[%s335 + $0x18] sm:$0xff] %vm826, %v1626
        %1631 = vst.msk [vmem:[%s335 + $0x28] sm:$0xff] %vm826, %v1627
        %1632 = vst.msk [vmem:[%s335 + $0x38] sm:$0xff] %vm826, %v1628
        %v1633 = vld [vmem:[#allocation2 + $0x8] sm:$0xff]
        %v1634 = vld [vmem:[#allocation2 + $0x18] sm:$0xff]
        %v1635 = vld [vmem:[#allocation2 + $0x28] sm:$0xff]
        %v1636 = vld [vmem:[#allocation2 + $0x38] sm:$0xff]
        %1641 = vrot.lane.b32.xlu0 %v1617, 112
        %v1642 = vpop.permute.xlu0 %1641
        %1643 = vrot.lane.b32.xlu0 %v1618, 112
        %v1644 = vpop.permute.xlu0 %1643
        %1645 = vrot.lane.b32.xlu0 %v1619, 112
        %v1646 = vpop.permute.xlu0 %1645
        %1647 = vrot.lane.b32.xlu0 %v1620, 112
        %v1648 = vpop.permute.xlu0 %1647
        %v1653 = vmul.f32 %v1633, %v1642
        %v1654 = vmul.f32 %v1634, %v1644
        %v1655 = vmul.f32 %v1635, %v1646
        %v1656 = vmul.f32 %v1636, %v1648
        %v1657 = vld [vmem:[%s328 + $0x8] sm:$0xff]
        %v1658 = vld [vmem:[%s328 + $0x18] sm:$0xff]
        %v1659 = vld [vmem:[%s328 + $0x28] sm:$0xff]
        %v1660 = vld [vmem:[%s328 + $0x38] sm:$0xff]
        %v1661 = vadd.f32 %v1653, %v1657
        %v1662 = vadd.f32 %v1654, %v1658
        %v1663 = vadd.f32 %v1655, %v1659
        %v1664 = vadd.f32 %v1656, %v1660
        %v1665 = vld [vmem:[#allocation3 + $0x8] sm:$0xff]
        %v1666 = vld [vmem:[#allocation3 + $0x18] sm:$0xff]
        %v1667 = vld [vmem:[#allocation3 + $0x28] sm:$0xff]
        %v1668 = vld [vmem:[#allocation3 + $0x38] sm:$0xff]
        %v1669 = vadd.f32 %v1665, %v1661
        %v1670 = vadd.f32 %v1666, %v1662
        %v1671 = vadd.f32 %v1667, %v1663
        %v1672 = vadd.f32 %v1668, %v1664
        %1673 = vst.msk [vmem:[%s335 + $0x8] sm:$0xff] %vm789, %v1669
        %1674 = vst.msk [vmem:[%s335 + $0x18] sm:$0xff] %vm789, %v1670
        %1675 = vst.msk [vmem:[%s335 + $0x28] sm:$0xff] %vm789, %v1671
        %1676 = vst.msk [vmem:[%s335 + $0x38] sm:$0xff] %vm789, %v1672
        %v1677 = vld [vmem:[#allocation2] sm:$0xff]
        %v1678 = vld [vmem:[#allocation2 + $0x10] sm:$0xff]
        %v1679 = vld [vmem:[#allocation2 + $0x20] sm:$0xff]
        %v1680 = vld [vmem:[#allocation2 + $0x30] sm:$0xff]
        %1685 = vrot.lane.b32.xlu0 %v1661, 112
        %v1686 = vpop.permute.xlu0 %1685
        %1687 = vrot.lane.b32.xlu0 %v1662, 112
        %v1688 = vpop.permute.xlu0 %1687
        %1689 = vrot.lane.b32.xlu0 %v1663, 112
        %v1690 = vpop.permute.xlu0 %1689
        %1691 = vrot.lane.b32.xlu0 %v1664, 112
        %v1692 = vpop.permute.xlu0 %1691
        %v1697 = vmul.f32 %v1677, %v1686
        %v1698 = vmul.f32 %v1678, %v1688
        %v1699 = vmul.f32 %v1679, %v1690
        %v1700 = vmul.f32 %v1680, %v1692
        %v1701 = vld [vmem:[%s328] sm:$0xff]
        %v1702 = vld [vmem:[%s328 + $0x10] sm:$0xff]
        %v1703 = vld [vmem:[%s328 + $0x20] sm:$0xff]
        %v1704 = vld [vmem:[%s328 + $0x30] sm:$0xff]
        %v1705 = vadd.f32 %v1697, %v1701
        %v1706 = vadd.f32 %v1698, %v1702
        %v1707 = vadd.f32 %v1699, %v1703
        %v1708 = vadd.f32 %v1700, %v1704
        %v1709 = vld [vmem:[#allocation3] sm:$0xff]
        %v1710 = vld [vmem:[#allocation3 + $0x10] sm:$0xff]
        %v1711 = vld [vmem:[#allocation3 + $0x20] sm:$0xff]
        %v1712 = vld [vmem:[#allocation3 + $0x30] sm:$0xff]
        %v1713 = vadd.f32 %v1709, %v1705
        %v1714 = vadd.f32 %v1710, %v1706
        %v1715 = vadd.f32 %v1711, %v1707
        %v1716 = vadd.f32 %v1712, %v1708
        %1717 = vst.msk [vmem:[%s335] sm:$0xff] %vm1048, %v1713
        %1718 = vst.msk [vmem:[%s335 + $0x10] sm:$0xff] %vm1048, %v1714
        %1719 = vst.msk [vmem:[%s335 + $0x20] sm:$0xff] %vm1048, %v1715
        %1720 = vst.msk [vmem:[%s335 + $0x30] sm:$0xff] %vm1048, %v1716
        %v1721 = vld [vmem:[#allocation2] sm:$0xff]
        %v1722 = vld [vmem:[#allocation2 + $0x10] sm:$0xff]
        %v1723 = vld [vmem:[#allocation2 + $0x20] sm:$0xff]
        %v1724 = vld [vmem:[#allocation2 + $0x30] sm:$0xff]
        %1729 = vrot.lane.b32.xlu0 %v1705, 112
        %v1730 = vpop.permute.xlu0 %1729
        %1731 = vrot.lane.b32.xlu0 %v1706, 112
        %v1732 = vpop.permute.xlu0 %1731
        %1733 = vrot.lane.b32.xlu0 %v1707, 112
        %v1734 = vpop.permute.xlu0 %1733
        %1735 = vrot.lane.b32.xlu0 %v1708, 112
        %v1736 = vpop.permute.xlu0 %1735
        %v1741 = vmul.f32 %v1721, %v1730
        %v1742 = vmul.f32 %v1722, %v1732
        %v1743 = vmul.f32 %v1723, %v1734
        %v1744 = vmul.f32 %v1724, %v1736
        %v1745 = vld [vmem:[%s328] sm:$0xff]
        %v1746 = vld [vmem:[%s328 + $0x10] sm:$0xff]
        %v1747 = vld [vmem:[%s328 + $0x20] sm:$0xff]
        %v1748 = vld [vmem:[%s328 + $0x30] sm:$0xff]
        %v1749 = vadd.f32 %v1741, %v1745
        %v1750 = vadd.f32 %v1742, %v1746
        %v1751 = vadd.f32 %v1743, %v1747
        %v1752 = vadd.f32 %v1744, %v1748
        %v1753 = vld [vmem:[#allocation3] sm:$0xff]
        %v1754 = vld [vmem:[#allocation3 + $0x10] sm:$0xff]
        %v1755 = vld [vmem:[#allocation3 + $0x20] sm:$0xff]
        %v1756 = vld [vmem:[#allocation3 + $0x30] sm:$0xff]
        %v1757 = vadd.f32 %v1753, %v1749
        %v1758 = vadd.f32 %v1754, %v1750
        %v1759 = vadd.f32 %v1755, %v1751
        %v1760 = vadd.f32 %v1756, %v1752
        %1761 = vst.msk [vmem:[%s335] sm:$0xff] %vm1011, %v1757
        %1762 = vst.msk [vmem:[%s335 + $0x10] sm:$0xff] %vm1011, %v1758
        %1763 = vst.msk [vmem:[%s335 + $0x20] sm:$0xff] %vm1011, %v1759
        %1764 = vst.msk [vmem:[%s335 + $0x30] sm:$0xff] %vm1011, %v1760
        %v1765 = vld [vmem:[#allocation2] sm:$0xff]
        %v1766 = vld [vmem:[#allocation2 + $0x10] sm:$0xff]
        %v1767 = vld [vmem:[#allocation2 + $0x20] sm:$0xff]
        %v1768 = vld [vmem:[#allocation2 + $0x30] sm:$0xff]
        %1773 = vrot.lane.b32.xlu0 %v1749, 112
        %v1774 = vpop.permute.xlu0 %1773
        %1775 = vrot.lane.b32.xlu0 %v1750, 112
        %v1776 = vpop.permute.xlu0 %1775
        %1777 = vrot.lane.b32.xlu0 %v1751, 112
        %v1778 = vpop.permute.xlu0 %1777
        %1779 = vrot.lane.b32.xlu0 %v1752, 112
        %v1780 = vpop.permute.xlu0 %1779
        %v1785 = vmul.f32 %v1765, %v1774
        %v1786 = vmul.f32 %v1766, %v1776
        %v1787 = vmul.f32 %v1767, %v1778
        %v1788 = vmul.f32 %v1768, %v1780
        %v1789 = vld [vmem:[%s328] sm:$0xff]
        %v1790 = vld [vmem:[%s328 + $0x10] sm:$0xff]
        %v1791 = vld [vmem:[%s328 + $0x20] sm:$0xff]
        %v1792 = vld [vmem:[%s328 + $0x30] sm:$0xff]
        %v1793 = vadd.f32 %v1785, %v1789
        %v1794 = vadd.f32 %v1786, %v1790
        %v1795 = vadd.f32 %v1787, %v1791
        %v1796 = vadd.f32 %v1788, %v1792
        %v1797 = vld [vmem:[#allocation3] sm:$0xff]
        %v1798 = vld [vmem:[#allocation3 + $0x10] sm:$0xff]
        %v1799 = vld [vmem:[#allocation3 + $0x20] sm:$0xff]
        %v1800 = vld [vmem:[#allocation3 + $0x30] sm:$0xff]
        %v1801 = vadd.f32 %v1797, %v1793
        %v1802 = vadd.f32 %v1798, %v1794
        %v1803 = vadd.f32 %v1799, %v1795
        %v1804 = vadd.f32 %v1800, %v1796
        %1805 = vst.msk [vmem:[%s335] sm:$0xff] %vm974, %v1801
        %1806 = vst.msk [vmem:[%s335 + $0x10] sm:$0xff] %vm974, %v1802
        %1807 = vst.msk [vmem:[%s335 + $0x20] sm:$0xff] %vm974, %v1803
        %1808 = vst.msk [vmem:[%s335 + $0x30] sm:$0xff] %vm974, %v1804
        %v1809 = vld [vmem:[#allocation2] sm:$0xff]
        %v1810 = vld [vmem:[#allocation2 + $0x10] sm:$0xff]
        %v1811 = vld [vmem:[#allocation2 + $0x20] sm:$0xff]
        %v1812 = vld [vmem:[#allocation2 + $0x30] sm:$0xff]
        %1817 = vrot.lane.b32.xlu0 %v1793, 112
        %v1818 = vpop.permute.xlu0 %1817
        %1819 = vrot.lane.b32.xlu0 %v1794, 112
        %v1820 = vpop.permute.xlu0 %1819
        %1821 = vrot.lane.b32.xlu0 %v1795, 112
        %v1822 = vpop.permute.xlu0 %1821
        %1823 = vrot.lane.b32.xlu0 %v1796, 112
        %v1824 = vpop.permute.xlu0 %1823
        %v1829 = vmul.f32 %v1809, %v1818
        %v1830 = vmul.f32 %v1810, %v1820
        %v1831 = vmul.f32 %v1811, %v1822
        %v1832 = vmul.f32 %v1812, %v1824
        %v1833 = vld [vmem:[%s328] sm:$0xff]
        %v1834 = vld [vmem:[%s328 + $0x10] sm:$0xff]
        %v1835 = vld [vmem:[%s328 + $0x20] sm:$0xff]
        %v1836 = vld [vmem:[%s328 + $0x30] sm:$0xff]
        %v1837 = vadd.f32 %v1829, %v1833
        %v1838 = vadd.f32 %v1830, %v1834
        %v1839 = vadd.f32 %v1831, %v1835
        %v1840 = vadd.f32 %v1832, %v1836
        %v1841 = vld [vmem:[#allocation3] sm:$0xff]
        %v1842 = vld [vmem:[#allocation3 + $0x10] sm:$0xff]
        %v1843 = vld [vmem:[#allocation3 + $0x20] sm:$0xff]
        %v1844 = vld [vmem:[#allocation3 + $0x30] sm:$0xff]
        %v1845 = vadd.f32 %v1841, %v1837
        %v1846 = vadd.f32 %v1842, %v1838
        %v1847 = vadd.f32 %v1843, %v1839
        %v1848 = vadd.f32 %v1844, %v1840
        %1849 = vst.msk [vmem:[%s335] sm:$0xff] %vm937, %v1845
        %1850 = vst.msk [vmem:[%s335 + $0x10] sm:$0xff] %vm937, %v1846
        %1851 = vst.msk [vmem:[%s335 + $0x20] sm:$0xff] %vm937, %v1847
        %1852 = vst.msk [vmem:[%s335 + $0x30] sm:$0xff] %vm937, %v1848
        %v1853 = vld [vmem:[#allocation2] sm:$0xff]
        %v1854 = vld [vmem:[#allocation2 + $0x10] sm:$0xff]
        %v1855 = vld [vmem:[#allocation2 + $0x20] sm:$0xff]
        %v1856 = vld [vmem:[#allocation2 + $0x30] sm:$0xff]
        %1861 = vrot.lane.b32.xlu0 %v1837, 112
        %v1862 = vpop.permute.xlu0 %1861
        %1863 = vrot.lane.b32.xlu0 %v1838, 112
        %v1864 = vpop.permute.xlu0 %1863
        %1865 = vrot.lane.b32.xlu0 %v1839, 112
        %v1866 = vpop.permute.xlu0 %1865
        %1867 = vrot.lane.b32.xlu0 %v1840, 112
        %v1868 = vpop.permute.xlu0 %1867
        %v1873 = vmul.f32 %v1853, %v1862
        %v1874 = vmul.f32 %v1854, %v1864
        %v1875 = vmul.f32 %v1855, %v1866
        %v1876 = vmul.f32 %v1856, %v1868
        %v1877 = vld [vmem:[%s328] sm:$0xff]
        %v1878 = vld [vmem:[%s328 + $0x10] sm:$0xff]
        %v1879 = vld [vmem:[%s328 + $0x20] sm:$0xff]
        %v1880 = vld [vmem:[%s328 + $0x30] sm:$0xff]
        %v1881 = vadd.f32 %v1873, %v1877
        %v1882 = vadd.f32 %v1874, %v1878
        %v1883 = vadd.f32 %v1875, %v1879
        %v1884 = vadd.f32 %v1876, %v1880
        %v1885 = vld [vmem:[#allocation3] sm:$0xff]
        %v1886 = vld [vmem:[#allocation3 + $0x10] sm:$0xff]
        %v1887 = vld [vmem:[#allocation3 + $0x20] sm:$0xff]
        %v1888 = vld [vmem:[#allocation3 + $0x30] sm:$0xff]
        %v1889 = vadd.f32 %v1885, %v1881
        %v1890 = vadd.f32 %v1886, %v1882
        %v1891 = vadd.f32 %v1887, %v1883
        %v1892 = vadd.f32 %v1888, %v1884
        %1893 = vst.msk [vmem:[%s335] sm:$0xff] %vm900, %v1889
        %1894 = vst.msk [vmem:[%s335 + $0x10] sm:$0xff] %vm900, %v1890
        %1895 = vst.msk [vmem:[%s335 + $0x20] sm:$0xff] %vm900, %v1891
        %1896 = vst.msk [vmem:[%s335 + $0x30] sm:$0xff] %vm900, %v1892
        %v1897 = vld [vmem:[#allocation2] sm:$0xff]
        %v1898 = vld [vmem:[#allocation2 + $0x10] sm:$0xff]
        %v1899 = vld [vmem:[#allocation2 + $0x20] sm:$0xff]
        %v1900 = vld [vmem:[#allocation2 + $0x30] sm:$0xff]
        %1905 = vrot.lane.b32.xlu0 %v1881, 112
        %v1906 = vpop.permute.xlu0 %1905
        %1907 = vrot.lane.b32.xlu0 %v1882, 112
        %v1908 = vpop.permute.xlu0 %1907
        %1909 = vrot.lane.b32.xlu0 %v1883, 112
        %v1910 = vpop.permute.xlu0 %1909
        %1911 = vrot.lane.b32.xlu0 %v1884, 112
        %v1912 = vpop.permute.xlu0 %1911
        %v1917 = vmul.f32 %v1897, %v1906
        %v1918 = vmul.f32 %v1898, %v1908
        %v1919 = vmul.f32 %v1899, %v1910
        %v1920 = vmul.f32 %v1900, %v1912
        %v1921 = vld [vmem:[%s328] sm:$0xff]
        %v1922 = vld [vmem:[%s328 + $0x10] sm:$0xff]
        %v1923 = vld [vmem:[%s328 + $0x20] sm:$0xff]
        %v1924 = vld [vmem:[%s328 + $0x30] sm:$0xff]
        %v1925 = vadd.f32 %v1917, %v1921
        %v1926 = vadd.f32 %v1918, %v1922
        %v1927 = vadd.f32 %v1919, %v1923
        %v1928 = vadd.f32 %v1920, %v1924
        %v1929 = vld [vmem:[#allocation3] sm:$0xff]
        %v1930 = vld [vmem:[#allocation3 + $0x10] sm:$0xff]
        %v1931 = vld [vmem:[#allocation3 + $0x20] sm:$0xff]
        %v1932 = vld [vmem:[#allocation3 + $0x30] sm:$0xff]
        %v1933 = vadd.f32 %v1929, %v1925
        %v1934 = vadd.f32 %v1930, %v1926
        %v1935 = vadd.f32 %v1931, %v1927
        %v1936 = vadd.f32 %v1932, %v1928
        %1937 = vst.msk [vmem:[%s335] sm:$0xff] %vm863, %v1933
        %1938 = vst.msk [vmem:[%s335 + $0x10] sm:$0xff] %vm863, %v1934
        %1939 = vst.msk [vmem:[%s335 + $0x20] sm:$0xff] %vm863, %v1935
        %1940 = vst.msk [vmem:[%s335 + $0x30] sm:$0xff] %vm863, %v1936
        %v1941 = vld [vmem:[#allocation2] sm:$0xff]
        %v1942 = vld [vmem:[#allocation2 + $0x10] sm:$0xff]
        %v1943 = vld [vmem:[#allocation2 + $0x20] sm:$0xff]
        %v1944 = vld [vmem:[#allocation2 + $0x30] sm:$0xff]
        %1949 = vrot.lane.b32.xlu0 %v1925, 112
        %v1950 = vpop.permute.xlu0 %1949
        %1951 = vrot.lane.b32.xlu0 %v1926, 112
        %v1952 = vpop.permute.xlu0 %1951
        %1953 = vrot.lane.b32.xlu0 %v1927, 112
        %v1954 = vpop.permute.xlu0 %1953
        %1955 = vrot.lane.b32.xlu0 %v1928, 112
        %v1956 = vpop.permute.xlu0 %1955
        %v1961 = vmul.f32 %v1941, %v1950
        %v1962 = vmul.f32 %v1942, %v1952
        %v1963 = vmul.f32 %v1943, %v1954
        %v1964 = vmul.f32 %v1944, %v1956
        %v1965 = vld [vmem:[%s328] sm:$0xff]
        %v1966 = vld [vmem:[%s328 + $0x10] sm:$0xff]
        %v1967 = vld [vmem:[%s328 + $0x20] sm:$0xff]
        %v1968 = vld [vmem:[%s328 + $0x30] sm:$0xff]
        %v1969 = vadd.f32 %v1961, %v1965
        %v1970 = vadd.f32 %v1962, %v1966
        %v1971 = vadd.f32 %v1963, %v1967
        %v1972 = vadd.f32 %v1964, %v1968
        %v1973 = vld [vmem:[#allocation3] sm:$0xff]
        %v1974 = vld [vmem:[#allocation3 + $0x10] sm:$0xff]
        %v1975 = vld [vmem:[#allocation3 + $0x20] sm:$0xff]
        %v1976 = vld [vmem:[#allocation3 + $0x30] sm:$0xff]
        %v1977 = vadd.f32 %v1973, %v1969
        %v1978 = vadd.f32 %v1974, %v1970
        %v1979 = vadd.f32 %v1975, %v1971
        %v1980 = vadd.f32 %v1976, %v1972
        %1981 = vst.msk [vmem:[%s335] sm:$0xff] %vm826, %v1977
        %1982 = vst.msk [vmem:[%s335 + $0x10] sm:$0xff] %vm826, %v1978
        %1983 = vst.msk [vmem:[%s335 + $0x20] sm:$0xff] %vm826, %v1979
        %1984 = vst.msk [vmem:[%s335 + $0x30] sm:$0xff] %vm826, %v1980
        %v1985 = vld [vmem:[#allocation2] sm:$0xff]
        %v1986 = vld [vmem:[#allocation2 + $0x10] sm:$0xff]
        %v1987 = vld [vmem:[#allocation2 + $0x20] sm:$0xff]
        %v1988 = vld [vmem:[#allocation2 + $0x30] sm:$0xff]
        %1993 = vrot.lane.b32.xlu0 %v1969, 112
        %v1994 = vpop.permute.xlu0 %1993
        %1995 = vrot.lane.b32.xlu0 %v1970, 112
        %v1996 = vpop.permute.xlu0 %1995
        %1997 = vrot.lane.b32.xlu0 %v1971, 112
        %v1998 = vpop.permute.xlu0 %1997
        %1999 = vrot.lane.b32.xlu0 %v1972, 112
        %v2000 = vpop.permute.xlu0 %1999
        %v2005 = vmul.f32 %v1985, %v1994
        %v2006 = vmul.f32 %v1986, %v1996
        %v2007 = vmul.f32 %v1987, %v1998
        %v2008 = vmul.f32 %v1988, %v2000
        %v2009 = vld [vmem:[%s328] sm:$0xff]
        %v2010 = vld [vmem:[%s328 + $0x10] sm:$0xff]
        %v2011 = vld [vmem:[%s328 + $0x20] sm:$0xff]
        %v2012 = vld [vmem:[%s328 + $0x30] sm:$0xff]
        %v2013 = vadd.f32 %v2005, %v2009
        %v2014 = vadd.f32 %v2006, %v2010
        %v2015 = vadd.f32 %v2007, %v2011
        %v2016 = vadd.f32 %v2008, %v2012
        %v2017 = vld [vmem:[#allocation3] sm:$0xff]
        %v2018 = vld [vmem:[#allocation3 + $0x10] sm:$0xff]
        %v2019 = vld [vmem:[#allocation3 + $0x20] sm:$0xff]
        %v2020 = vld [vmem:[#allocation3 + $0x30] sm:$0xff]
        %v2021 = vadd.f32 %v2017, %v2013
        %v2022 = vadd.f32 %v2018, %v2014
        %v2023 = vadd.f32 %v2019, %v2015
        %v2024 = vadd.f32 %v2020, %v2016
        %2025 = vst.msk [vmem:[%s335] sm:$0xff] %vm789, %v2021
        %2026 = vst.msk [vmem:[%s335 + $0x10] sm:$0xff] %vm789, %v2022
        %2027 = vst.msk [vmem:[%s335 + $0x20] sm:$0xff] %vm789, %v2023
        %2028 = vst.msk [vmem:[%s335 + $0x30] sm:$0xff] %vm789, %v2024
        %s2029 = sand.u32 %s176, 1
        %s2030 = scalar_lea.sflag [#allocation5], %s2029
        %s2031 = sand.u32 %s176, 1
        %s2032 = smul.addr %s2031, 64
        %s2033 = scalar_lea.vmem [#allocation4], %s2032
        %s2034 = sand.u32 %s204, 1
        %s2035 = scalar_lea.sflag [#allocation7], %s2034
        %s2036 = sand.u32 %s204, 1
        %s2037 = smul.addr %s2036, 64
        %s2038 = scalar_lea.vmem [#allocation6], %s2037
        // Predicated region
        $region41: #{tpu_custom_call.1} parent=39 // pred_check
          %p2039 = pneg %p186
        $region42: #{tpu_custom_call.1} parent=39 // pred_check_branch
          %2041 = sbr.rel (%p2039) target = $region44
        $region43: #{tpu_custom_call.1} parent=39 // pred_region
          %s2042 = smul.u32 4, %s29
          %2044 = vsyncadd %s2030, 0
          %s2045 = smul.addr %s2042, 2
          %s2046 = smul.addr %s28, 8
          %s2047 = sadd.s32 %s2045, %s2046
          %s2048 = smul.addr %s2047, 8
          %s2049 = scalar_lea.hbm %s5, %s2048
          %s2050 = sshll.u32 %s2033, 4
          %s2051 = int_to_ptr.vmem [resolvable:$true] %s2050
          %s2052 = sshll.u32 %s2049, 4
          %s2053 = int_to_ptr.hbm [resolvable:$true] %s2052
          %2058 = dma.vmem_to_hbm [thread:$0]  %s2051, 1024, %s2053, %s2030, 256, 256, 16
        $region44: #{tpu_custom_call.1} parent=39 // pred_fallthru
          _
        // Predicated region
        $region45: #{tpu_custom_call.1} parent=39 // pred_check
          %p2059 = pneg %p214
        $region46: #{tpu_custom_call.1} parent=39 // pred_check_branch
          %2061 = sbr.rel (%p2059) target = $region48
        $region47: #{tpu_custom_call.1} parent=39 // pred_region
          %s2062 = smul.u32 4, %s29
          %2064 = vsyncadd %s2035, 0
          %s2065 = smul.addr %s2062, 2
          %s2066 = smul.addr %s28, 8
          %s2067 = sadd.s32 %s2065, %s2066
          %s2068 = smul.addr %s2067, 8
          %s2069 = scalar_lea.hbm %s6, %s2068
          %s2070 = sshll.u32 %s2038, 4
          %s2071 = int_to_ptr.vmem [resolvable:$true] %s2070
          %s2072 = sshll.u32 %s2069, 4
          %s2073 = int_to_ptr.hbm [resolvable:$true] %s2072
          %2078 = dma.vmem_to_hbm [thread:$0]  %s2071, 1024, %s2073, %s2035, 256, 256, 16
        $region48: #{tpu_custom_call.1} parent=39 // pred_fallthru
          _
      $region40: #{tpu_custom_call.1} parent=5 // pred_fallthru
        _
      %p2079 = scmp.le.s32.totalorder 2, %s19
      // Predicated region
      $region49: #{tpu_custom_call.1} parent=5 // pred_check
        %p2080 = pneg %p2079
      $region50: #{tpu_custom_call.1} parent=5 // pred_check_branch
        %2082 = sbr.rel (%p2080) target = $region52
      $region51: #{tpu_custom_call.1} parent=5 // pred_region
        %s2083 = ssub.s32 %s19, 2
        // Predicated region
        $region53: #{tpu_custom_call.1} parent=51 // pred_check
          %p2084 = pneg %p192
        $region54: #{tpu_custom_call.1} parent=51 // pred_check_branch
          %2086 = sbr.rel (%p2084) target = $region56
        $region55: #{tpu_custom_call.1} parent=51 // pred_region
          %s2087 = sand.u32 %s177, 1
          %s2088 = scalar_lea.sflag [#allocation5], %s2087
          %s2089 = sand.u32 %s177, 1
          %s2090 = smul.addr %s2089, 64
          %s2091 = scalar_lea.vmem [#allocation4], %s2090
          %2093 = dma.done %s2088, 1024
        $region56: #{tpu_custom_call.1} parent=51 // pred_fallthru
          _
        // Predicated region
        $region57: #{tpu_custom_call.1} parent=51 // pred_check
          %p2094 = pneg %p220
        $region58: #{tpu_custom_call.1} parent=51 // pred_check_branch
          %2096 = sbr.rel (%p2094) target = $region60
        $region59: #{tpu_custom_call.1} parent=51 // pred_region
          %s2097 = sand.u32 %s205, 1
          %s2098 = scalar_lea.sflag [#allocation7], %s2097
          %s2099 = sand.u32 %s205, 1
          %s2100 = smul.addr %s2099, 64
          %s2101 = scalar_lea.vmem [#allocation6], %s2100
          %2103 = dma.done %s2098, 1024
        $region60: #{tpu_custom_call.1} parent=51 // pred_fallthru
          _
      $region52: #{tpu_custom_call.1} parent=5 // pred_fallthru
        _
    $region6: #{tpu_custom_call.1} parent=1 // loop_footer
      %s23 = sadd.s32 1, %s19
    $region7: #{tpu_custom_call.1} parent=1 // loop_footer_branch
      %18 = sbr.rel target = $region3
    $region8: #{tpu_custom_call.1} parent=1 // loop_exit
      _
    %2104 = vsyncpa [#allocation5], 1
    %s2105 = scalar_lea.sflag [#allocation5], 1
    %2106 = vsyncpa %s2105, 1
    %2107 = vsyncpa [#allocation7], 1
    %s2108 = scalar_lea.sflag [#allocation7], 1
    %2109 = vsyncpa %s2108, 1

</llo_original>
